<compile_context>
chip_gen: v6e
topology: v6e:2x2x1
jax: 0.10.0
libtpu: 0.0.40
codegen_flags: <defaults>
</compile_context>

<pallas_src>
import functools
import math

import jax
import jax.numpy as jnp
import numpy as np
from jax import lax
from jax.experimental import pallas as pl
from jax.experimental.pallas import tpu as pltpu


def _round_up(x, m):
    return ((x + m - 1) // m) * m


def _tpu_generation_params():
    """Returns (mxu_rows, vmem_limit_bytes) tuned for the current TPU generation."""
    vmem_cap = 128 * 1024 * 1024
    try:
        vmem_cap = int(pltpu.get_tpu_info().vmem_capacity_bytes)
    except Exception:
        pass
    kind = ""
    try:
        kind = jax.devices()[0].device_kind.lower()
    except Exception:
        pass
    # v2..v5 MXUs are 128 rows wide; v6e / v7x are 256 wide (default new -> 256).
    mxu_rows = 128 if any(t in kind for t in ("v2", "v3", "v4", "v5")) else 256
    # Stay well below physical VMEM (v7x only has 64 MiB per TensorCore) so the
    # x-block double-buffering and Mosaic internal scratch keep headroom:
    # 48 MiB on v7x, 64 MiB on v5e/v6e.
    vmem_limit = int(min(64 * 1024 * 1024, (vmem_cap * 3) // 4))
    return mxu_rows, vmem_limit


def _attn_kernel(
    x_ref,    # (block_b, t_pad, din_pad)   compute dtype (bf16 by default)
    w_ref,    # (din_pad, 3 * dout_pad)     compute dtype, columns = [wq | wk | wv]
    o_ref,    # (block_b, tq, dout_pad)     float32
    q_scr,    # (block_b, tq, dout_pad)     compute dtype scratch (scaled Q)
    k_scr,    # (block_b, t_pad, dout_pad)  compute dtype scratch
    v_scr,    # (block_b, t_pad, dout_pad)  compute dtype scratch
    *,
    num_tokens,    # static: real sequence length (key-padding mask)
    dout_pad,      # static: padded d_out (column stride in the fused weight)
    tq,            # static: query rows per grid step
    block_b,       # static: batches folded into one grid step
    scale,         # static: 1 / sqrt(d_out)
    full_q,        # static: True when tq == t_pad (single query tile per batch)
    approx_recip,  # static: EUP approx reciprocal (bf16) vs exact (f32 path)
):
    t_pad = x_ref.shape[1]
    din_pad = x_ref.shape[2]
    f32 = jnp.float32
    cdt = x_ref.dtype                          # MXU compute dtype

    qi = pl.program_id(1)
    q_start = pl.multiple_of(qi * tq, tq)      # global row offset of this q tile

    if full_q:
        # Single query tile: ONE fused (M, din) @ (din, 3*dout) MXU matmul gives
        # Q, K and V for the whole batch block (f32 accumulation).
        x_all = x_ref[...].reshape(block_b * t_pad, din_pad)
        proj = jnp.dot(x_all, w_ref[...], preferred_element_type=f32)
        for bi in range(block_b):              # static store loop (block_b small)
            r0 = bi * t_pad
            q_scr[bi] = (proj[r0:r0 + t_pad, 0 * dout_pad:1 * dout_pad]
                         * scale).astype(cdt)
            k_scr[bi] = proj[r0:r0 + t_pad, 1 * dout_pad:2 * dout_pad].astype(cdt)
            v_scr[bi] = proj[r0:r0 + t_pad, 2 * dout_pad:3 * dout_pad].astype(cdt)
    else:
        # K/V projection hoisted out of the query-tile axis: computed once per
        # batch block (inner grid axis is "arbitrary"), reused for all q tiles.
        @pl.when(qi == 0)
        def _():
            x_all = x_ref[...].reshape(block_b * t_pad, din_pad)
            kv = jnp.dot(x_all, w_ref[:, pl.ds(dout_pad, 2 * dout_pad)],
                         preferred_element_type=f32)
            for bi in range(block_b):
                r0 = bi * t_pad
                k_scr[bi] = kv[r0:r0 + t_pad, :dout_pad].astype(cdt)
                v_scr[bi] = kv[r0:r0 + t_pad, dout_pad:].astype(cdt)

        # Q for this tile, projected for the WHOLE batch block in one matmul.
        x_q = x_ref[:, pl.ds(q_start, tq), :].reshape(block_b * tq, din_pad)
        q = jnp.dot(x_q, w_ref[:, pl.ds(0, dout_pad)], preferred_element_type=f32)
        for bi in range(block_b):
            q_scr[bi] = (q[bi * tq:(bi + 1) * tq, :] * scale).astype(cdt)

    # Causal + key-padding mask from 2-D iota compares (no HBM mask array).
    row_ids = q_start + lax.broadcasted_iota(jnp.int32, (tq, t_pad), 0)
    col_ids = lax.broadcasted_iota(jnp.int32, (tq, t_pad), 1)
    masked = (col_ids > row_ids) | (col_ids >= num_tokens)
    neg_big = jnp.float32(-1e30)               # finite "-inf": exp underflows to 0

    def body(bi, carry):
        q_b = q_scr[bi]                        # (tq, dout_pad)    compute dtype
        k_b = k_scr[bi]                        # (t_pad, dout_pad) compute dtype
        v_b = v_scr[bi]
        # scores = Q @ K^T via the MXU-native "NT" contraction; f32 accumulation.
        scores = lax.dot_general(q_b, k_b, (((1,), (1,)), ((), ())),
                                 preferred_element_type=f32)   # (tq, t_pad)
        scores = jnp.where(masked, neg_big, scores)
        # Numerically stable softmax over keys, kept entirely in f32.
        m = jnp.max(scores, axis=-1, keepdims=True)
        e = jnp.exp(scores - m)
        denom = jnp.sum(e, axis=-1, keepdims=True)
        attn = e * pl.reciprocal(denom, approx=approx_recip)
        # dropout(p=0.0) == identity
        ctx = jnp.dot(attn.astype(cdt), v_b, preferred_element_type=f32)
        o_ref[bi] = ctx.astype(o_ref.dtype)
        return carry

    lax.fori_loop(0, block_b, body, 0, unroll=True)


def causal_attention(x, w_query, w_key, w_value, *, d_out, tq=None, block_b=None,
                     compute_dtype=jnp.bfloat16):
    """x: (B, T, d_in) f32.  w_*: (d_in, d_out) f32.  Returns (B, T, d_out) f32."""
    b, num_tokens, d_in = x.shape
    scale = 1.0 / math.sqrt(d_out)             # keys.shape[-1] ** 0.5

    # TPU-friendly padded sizes.
    din_pad = max(128, _round_up(d_in, 128))
    dout_pad = max(128, _round_up(d_out, 128))
    t_pad = _round_up(num_tokens, 8)
    if tq is None:
        tq = t_pad if t_pad <= 256 else 128     # query tile size
    tq = _round_up(min(tq, t_pad), 8)
    t_pad = _round_up(t_pad, tq)                # make tq divide t_pad
    n_q = t_pad // tq

    mxu_rows, vmem_limit = _tpu_generation_params()

    if block_b is None:
        # Fold batches into the projection M-dim when T is tiny so the fused
        # matmul fills the MXU (target M ~ 128 on v5e, ~256 on v6e/v7x), but keep
        # n_b >= 2 parallel grid steps so both v7x TensorCores stay busy.
        block_b = 1
        if b >= 2 and t_pad < mxu_rows:
            block_b = max(1, min(b // 2, mxu_rows // t_pad))
    block_b = max(1, min(block_b, b))
    while b % block_b:
        block_b -= 1
    n_b = b // block_b

    # Pad inputs; fuse the three projection weights as [wq | wk | wv].
    x_p = jnp.zeros((b, t_pad, din_pad), jnp.float32).at[:, :num_tokens, :d_in].set(x)
    w_fused = jnp.zeros((din_pad, 3 * dout_pad), jnp.float32)
    w_fused = w_fused.at[:d_in, 0 * dout_pad:0 * dout_pad + d_out].set(w_query)
    w_fused = w_fused.at[:d_in, 1 * dout_pad:1 * dout_pad + d_out].set(w_key)
    w_fused = w_fused.at[:d_in, 2 * dout_pad:2 * dout_pad + d_out].set(w_value)
    # Cast at the pallas_call boundary: compute-dtype HBM/VMEM traffic + MXU rate;
    # accumulation and the softmax stay f32 inside the kernel.
    x_p = x_p.astype(compute_dtype)
    w_fused = w_fused.astype(compute_dtype)

    approx_recip = np.dtype(compute_dtype) != np.dtype(jnp.float32)

    kernel = functools.partial(
        _attn_kernel,
        num_tokens=num_tokens, dout_pad=dout_pad, tq=tq, block_b=block_b,
        scale=scale, full_q=(n_q == 1), approx_recip=approx_recip,
    )

    def _call(w_spec):
        return pl.pallas_call(
            kernel,
            out_shape=jax.ShapeDtypeStruct((b, t_pad, dout_pad), jnp.float32),
            grid_spec=pltpu.PrefetchScalarGridSpec(
                num_scalar_prefetch=0,
                grid=(n_b, n_q),                # batch-block outer, query-tile inner
                in_specs=[
                    # x: all tokens of this batch block (K/V need every row).  The
                    # block index is constant over the inner q axis, so it is not
                    # re-fetched per query tile.
                    pl.BlockSpec((block_b, t_pad, din_pad), lambda bi, qi: (bi, 0, 0)),
                    w_spec,
                ],
                out_specs=pl.BlockSpec((block_b, tq, dout_pad),
                                       lambda bi, qi: (bi, qi, 0)),
                scratch_shapes=[
                    pltpu.VMEM((block_b, tq, dout_pad), compute_dtype),     # Q
                    pltpu.VMEM((block_b, t_pad, dout_pad), compute_dtype),  # K
                    pltpu.VMEM((block_b, t_pad, dout_pad), compute_dtype),  # V
                ],
            ),
            compiler_params=pltpu.CompilerParams(
                # Inner (query-tile) axis is "arbitrary": the K/V scratch carries
                # state across it.  Outer batch-block axis is "parallel".
                dimension_semantics=("parallel", "arbitrary"),
                vmem_limit_bytes=vmem_limit,
            ),
        )(x_p, w_fused)

    w_shape = (din_pad, 3 * dout_pad)
    w_map = lambda bi, qi: (0, 0)
    try:
        # Grid-invariant fused-weight block: single-buffer it (no point
        # double-buffering a block whose index never changes).
        out_p = _call(pl.BlockSpec(w_shape, w_map, pipeline_mode=pl.Buffered(1)))
    except Exception:
        # Fallback: default (double-buffered) weight block.
        out_p = _call(pl.BlockSpec(w_shape, w_map))

    return out_p[:, :num_tokens, :d_out]


def _reference(x, wq, wk, wv, d_out):
    q = x @ wq
    k = x @ wk
    v = x @ wv
    scores = jnp.einsum("btd,bsd->bts", q, k)
    t = x.shape[1]
    causal = jnp.triu(jnp.ones((t, t), bool), k=1)
    scores = jnp.where(causal[None], -jnp.inf, scores)
    w = jax.nn.softmax(scores / math.sqrt(d_out), axis=-1)
    return w @ v


if __name__ == "__main__":
    # Inputs from the reference script: 6 tokens, d_in=3, stacked into batch of 2.
    inputs = jnp.array(
        [
            [0.43, 0.15, 0.89],
            [0.55, 0.87, 0.66],
            [0.57, 0.85, 0.64],
            [0.22, 0.58, 0.33],
            [0.77, 0.25, 0.10],
            [0.05, 0.80, 0.55],
        ],
        dtype=jnp.float32,
    )
    batch = jnp.stack([inputs, inputs], axis=0)  # (2, 6, 3)
    d_in, d_out = 3, 2

    key = jax.random.PRNGKey(0)
    kq, kk, kv, kx = jax.random.split(key, 4)
    bound = 1.0 / math.sqrt(d_in)   # PyTorch Linear default init range (no bias)
    w_query = jax.random.uniform(kq, (d_in, d_out), jnp.float32, -bound, bound)
    w_key = jax.random.uniform(kk, (d_in, d_out), jnp.float32, -bound, bound)
    w_value = jax.random.uniform(kv, (d_in, d_out), jnp.float32, -bound, bound)

    ref = _reference(batch, w_query, w_key, w_value, d_out)

    # Default (bf16 MXU) path, single query tile (full_q branch).
    out = causal_attention(batch, w_query, w_key, w_value, d_out=d_out)
    out = jax.block_until_ready(out)
    assert out.shape == (2, 6, 2), out.shape
    assert jnp.allclose(out, ref, atol=3e-2, rtol=3e-2), (out, ref)

    # Full-f32 compute path (exact reciprocal): tight structural check.
    out_f32 = causal_attention(batch, w_query, w_key, w_value, d_out=d_out,
                               compute_dtype=jnp.float32)
    out_f32 = jax.block_until_ready(out_f32)
    assert jnp.allclose(out_f32, ref, atol=5e-3, rtol=5e-3), (out_f32, ref)

    # Second config: exercises the tiled-q path (tq < t_pad, hoisted K/V scratch
    # under pl.when), batch folding (block_b=2) and token/feature padding.
    b2, t2, di2, do2 = 4, 21, 5, 3
    kx2, kq2, kk2, kv2 = jax.random.split(kx, 4)
    x2 = jax.random.uniform(kx2, (b2, t2, di2), jnp.float32)
    bound2 = 1.0 / math.sqrt(di2)
    wq2 = jax.random.uniform(kq2, (di2, do2), jnp.float32, -bound2, bound2)
    wk2 = jax.random.uniform(kk2, (di2, do2), jnp.float32, -bound2, bound2)
    wv2 = jax.random.uniform(kv2, (di2, do2), jnp.float32, -bound2, bound2)
    ref2 = _reference(x2, wq2, wk2, wv2, do2)

    out2 = causal_attention(x2, wq2, wk2, wv2, d_out=do2, tq=8, block_b=2)
    out2 = jax.block_until_ready(out2)
    assert out2.shape == (b2, t2, do2), out2.shape
    assert jnp.allclose(out2, ref2, atol=3e-2, rtol=3e-2), float(
        jnp.max(jnp.abs(out2 - ref2)))

    # Tiled-q path in full f32 (tight tolerance, exact reciprocal).
    out2_f32 = causal_attention(x2, wq2, wk2, wv2, d_out=do2, tq=8, block_b=2,
                                compute_dtype=jnp.float32)
    out2_f32 = jax.block_until_ready(out2_f32)
    assert jnp.allclose(out2_f32, ref2, atol=5e-3, rtol=5e-3), float(
        jnp.max(jnp.abs(out2_f32 - ref2)))

    print("KERNEL_OK")
</pallas_src>

<mosaic_0001>
module attributes {stable_mosaic.version = 11 : i64} {
  func.func @_attn_kernel(%arg0: i32, %arg1: i32, %arg2: memref<1x8x128xbf16, #tpu.memory_space<vmem>>, %arg3: memref<128x384xbf16, #tpu.memory_space<vmem>>, %arg4: memref<1x8x128xf32, #tpu.memory_space<vmem>>, %arg5: memref<1x8x128xbf16, #tpu.memory_space<vmem>>, %arg6: memref<1x8x128xbf16, #tpu.memory_space<vmem>>, %arg7: memref<1x8x128xbf16, #tpu.memory_space<vmem>>) attributes {dimension_semantics = [#tpu.dimension_semantics<parallel>, #tpu.dimension_semantics<arbitrary>], iteration_bounds = array<i64: 2, 1>, scalar_prefetch = 0 : i64, scratch_operands = 3 : i64, tpu.core_type = #tpu.core_type<tc>, window_params = [{transform_indices = @transform_0, window_bounds = array<i64: 1, 8, 128>}, {pipeline_mode = #tpu.pipeline_mode<synchronous>, transform_indices = @transform_1, window_bounds = array<i64: 128, 384>}, {transform_indices = @transform_2, window_bounds = array<i64: 1, 8, 128>}]} {
    %c8_i32 = arith.constant 8 : i32
    %0 = arith.muli %arg1, %c8_i32 : i32
    %1 = tpu.assume_multiple %0, 8 : i32
    %c0 = arith.constant 0 : index
    %c0_0 = arith.constant 0 : index
    %c0_1 = arith.constant 0 : index
    %2 = vector.load %arg2[%c0, %c0_0, %c0_1] : memref<1x8x128xbf16, #tpu.memory_space<vmem>>, vector<1x8x128xbf16>
    %3 = vector.shape_cast %2 : vector<1x8x128xbf16> to vector<8x128xbf16>
    %c0_2 = arith.constant 0 : index
    %c0_3 = arith.constant 0 : index
    %4 = vector.load %arg3[%c0_2, %c0_3] : memref<128x384xbf16, #tpu.memory_space<vmem>>, vector<128x384xbf16>
    %cst = arith.constant dense<0.000000e+00> : vector<8x384xf32>
    %5 = tpu.matmul %3, %4, %cst {dimension_numbers = #tpu.dot_dimension_numbers<[1], [0], [0], [1], [0, 0, 1, 1], [], []>} : vector<8x128xbf16>, vector<128x384xbf16>, vector<8x384xf32> -> vector<8x384xf32>
    %6 = vector.extract_strided_slice %5 {offsets = [0, 0], sizes = [8, 128], strides = [1, 1]} : vector<8x384xf32> to vector<8x128xf32>
    %cst_4 = arith.constant 0.707106769 : f32
    %7 = vector.broadcast %cst_4 : f32 to vector<8x128xf32>
    %8 = arith.mulf %6, %7 : vector<8x128xf32>
    %9 = arith.truncf %8 : vector<8x128xf32> to vector<8x128xbf16>
    %c0_5 = arith.constant 0 : index
    %c0_6 = arith.constant 0 : index
    %c0_7 = arith.constant 0 : index
    %10 = vector.load %arg5[%c0_5, %c0_6, %c0_7] : memref<1x8x128xbf16, #tpu.memory_space<vmem>>, vector<1x8x128xbf16>
    %11 = vector.shape_cast %10 : vector<1x8x128xbf16> to vector<8x128xbf16>
    %12 = vector.shape_cast %9 : vector<8x128xbf16> to vector<1x8x128xbf16>
    tpu.vector_store %arg5[%c0_5, %c0_6, %c0_7], %12 {strides = array<i32>} : memref<1x8x128xbf16, #tpu.memory_space<vmem>>, vector<1x8x128xbf16>,
    %13 = vector.extract_strided_slice %5 {offsets = [0, 128], sizes = [8, 128], strides = [1, 1]} : vector<8x384xf32> to vector<8x128xf32>
    %14 = arith.truncf %13 : vector<8x128xf32> to vector<8x128xbf16>
    %c0_8 = arith.constant 0 : index
    %c0_9 = arith.constant 0 : index
    %c0_10 = arith.constant 0 : index
    %15 = vector.load %arg6[%c0_8, %c0_9, %c0_10] : memref<1x8x128xbf16, #tpu.memory_space<vmem>>, vector<1x8x128xbf16>
    %16 = vector.shape_cast %15 : vector<1x8x128xbf16> to vector<8x128xbf16>
    %17 = vector.shape_cast %14 : vector<8x128xbf16> to vector<1x8x128xbf16>
    tpu.vector_store %arg6[%c0_8, %c0_9, %c0_10], %17 {strides = array<i32>} : memref<1x8x128xbf16, #tpu.memory_space<vmem>>, vector<1x8x128xbf16>,
    %18 = vector.extract_strided_slice %5 {offsets = [0, 256], sizes = [8, 128], strides = [1, 1]} : vector<8x384xf32> to vector<8x128xf32>
    %19 = arith.truncf %18 : vector<8x128xf32> to vector<8x128xbf16>
    %c0_11 = arith.constant 0 : index
    %c0_12 = arith.constant 0 : index
    %c0_13 = arith.constant 0 : index
    %20 = vector.load %arg7[%c0_11, %c0_12, %c0_13] : memref<1x8x128xbf16, #tpu.memory_space<vmem>>, vector<1x8x128xbf16>
    %21 = vector.shape_cast %20 : vector<1x8x128xbf16> to vector<8x128xbf16>
    %22 = vector.shape_cast %19 : vector<8x128xbf16> to vector<1x8x128xbf16>
    tpu.vector_store %arg7[%c0_11, %c0_12, %c0_13], %22 {strides = array<i32>} : memref<1x8x128xbf16, #tpu.memory_space<vmem>>, vector<1x8x128xbf16>,
    %23 = tpu.iota {dimensions = array<i32: 0>} : vector<8x8xi32>
    %24 = vector.broadcast %1 : i32 to vector<8x8xi32>
    %25 = arith.addi %24, %23 : vector<8x8xi32>
    %26 = tpu.iota {dimensions = array<i32: 1>} : vector<8x8xi32>
    %27 = arith.cmpi sgt, %26, %25 : vector<8x8xi32>
    %c6_i32 = arith.constant 6 : i32
    %28 = vector.broadcast %c6_i32 : i32 to vector<8x8xi32>
    %29 = arith.cmpi sge, %26, %28 : vector<8x8xi32>
    %30 = arith.ori %27, %29 : vector<8x8xi1>
    %cst_14 = arith.constant -1.000000e+30 : f32
    %c0_i32 = arith.constant 0 : i32
    %31 = arith.index_cast %c0_i32 : i32 to index
    %c0_15 = arith.constant 0 : index
    %c0_16 = arith.constant 0 : index
    %32 = vector.load %arg5[%31, %c0_15, %c0_16] : memref<1x8x128xbf16, #tpu.memory_space<vmem>>, vector<1x8x128xbf16>
    %33 = vector.shape_cast %32 : vector<1x8x128xbf16> to vector<8x128xbf16>
    %34 = arith.index_cast %c0_i32 : i32 to index
    %c0_17 = arith.constant 0 : index
    %c0_18 = arith.constant 0 : index
    %35 = vector.load %arg6[%34, %c0_17, %c0_18] : memref<1x8x128xbf16, #tpu.memory_space<vmem>>, vector<1x8x128xbf16>
    %36 = vector.shape_cast %35 : vector<1x8x128xbf16> to vector<8x128xbf16>
    %37 = arith.index_cast %c0_i32 : i32 to index
    %c0_19 = arith.constant 0 : index
    %c0_20 = arith.constant 0 : index
    %38 = vector.load %arg7[%37, %c0_19, %c0_20] : memref<1x8x128xbf16, #tpu.memory_space<vmem>>, vector<1x8x128xbf16>
    %39 = vector.shape_cast %38 : vector<1x8x128xbf16> to vector<8x128xbf16>
    %cst_21 = arith.constant dense<0.000000e+00> : vector<8x8xf32>
    %40 = tpu.matmul %33, %36, %cst_21 {dimension_numbers = #tpu.dot_dimension_numbers<[1], [1], [0], [0], [0, 0, 1, 0], [], []>} : vector<8x128xbf16>, vector<8x128xbf16>, vector<8x8xf32> -> vector<8x8xf32>
    %41 = vector.broadcast %cst_14 : f32 to vector<8x8xf32>
    %42 = arith.select %30, %41, %40 : vector<8x8xi1>, vector<8x8xf32>
    %cst_22 = arith.constant dense<0xFF800000> : vector<8xf32>
    %43 = vector.multi_reduction <maximumf>, %42, %cst_22 [1] : vector<8x8xf32> to vector<8xf32>
    %44 = vector.shape_cast %43 : vector<8xf32> to vector<8x1xf32>
    %45 = vector.broadcast %44 : vector<8x1xf32> to vector<8x8xf32>
    %46 = arith.subf %42, %45 : vector<8x8xf32>
    %47 = math.exp %46 : vector<8x8xf32>
    %cst_23 = arith.constant dense<0.000000e+00> : vector<8xf32>
    %48 = vector.multi_reduction <add>, %47, %cst_23 [1] : vector<8x8xf32> to vector<8xf32>
    %49 = vector.shape_cast %48 : vector<8xf32> to vector<8x1xf32>
    %50 = tpu.reciprocal %49 {approx = true} : vector<8x1xf32> -> vector<8x1xf32>
    %51 = vector.broadcast %50 : vector<8x1xf32> to vector<8x8xf32>
    %52 = arith.mulf %47, %51 : vector<8x8xf32>
    %53 = arith.truncf %52 : vector<8x8xf32> to vector<8x8xbf16>
    %cst_24 = arith.constant dense<0.000000e+00> : vector<8x128xf32>
    %54 = tpu.matmul %53, %39, %cst_24 {dimension_numbers = #tpu.dot_dimension_numbers<[1], [0], [0], [1], [0, 0, 1, 1], [], []>} : vector<8x8xbf16>, vector<8x128xbf16>, vector<8x128xf32> -> vector<8x128xf32>
    %55 = arith.index_cast %c0_i32 : i32 to index
    %c0_25 = arith.constant 0 : index
    %c0_26 = arith.constant 0 : index
    %56 = vector.load %arg4[%55, %c0_25, %c0_26] : memref<1x8x128xf32, #tpu.memory_space<vmem>>, vector<1x8x128xf32>
    %57 = vector.shape_cast %56 : vector<1x8x128xf32> to vector<8x128xf32>
    %58 = vector.shape_cast %54 : vector<8x128xf32> to vector<1x8x128xf32>
    tpu.vector_store %arg4[%55, %c0_25, %c0_26], %58 {strides = array<i32>} : memref<1x8x128xf32, #tpu.memory_space<vmem>>, vector<1x8x128xf32>,
    %c1_i32 = arith.constant 1 : i32
    return
  }
  func.func @transform_0(%arg0: i32, %arg1: i32) -> (i32, i32, i32) {
    %c0_i32 = arith.constant 0 : i32
    %c0_i32_0 = arith.constant 0 : i32
    %c0_i32_1 = arith.constant 0 : i32
    return %arg0, %c0_i32, %c0_i32_0 : i32, i32, i32
  }
  func.func @transform_1(%arg0: i32, %arg1: i32) -> (i32, i32) {
    %c0_i32 = arith.constant 0 : i32
    %c0_i32_0 = arith.constant 0 : i32
    %c0_i32_1 = arith.constant 0 : i32
    return %c0_i32, %c0_i32_0 : i32, i32
  }
  func.func @transform_2(%arg0: i32, %arg1: i32) -> (i32, i32, i32) {
    %c0_i32 = arith.constant 0 : i32
    %c0_i32_0 = arith.constant 0 : i32
    return %arg0, %arg1, %c0_i32 : i32, i32, i32
  }
}

module attributes {stable_mosaic.version = 11 : i64} {
  func.func @_attn_kernel(%arg0: i32, %arg1: i32, %arg2: memref<1x8x128xbf16, #tpu.memory_space<vmem>>, %arg3: memref<128x384xbf16, #tpu.memory_space<vmem>>, %arg4: memref<1x8x128xf32, #tpu.memory_space<vmem>>, %arg5: memref<1x8x128xbf16, #tpu.memory_space<vmem>>, %arg6: memref<1x8x128xbf16, #tpu.memory_space<vmem>>, %arg7: memref<1x8x128xbf16, #tpu.memory_space<vmem>>) attributes {dimension_semantics = [#tpu.dimension_semantics<parallel>, #tpu.dimension_semantics<arbitrary>], iteration_bounds = array<i64: 2, 1>, scalar_prefetch = 0 : i64, scratch_operands = 3 : i64, tpu.core_type = #tpu.core_type<tc>, window_params = [{transform_indices = @transform_0, window_bounds = array<i64: 1, 8, 128>}, {pipeline_mode = #tpu.pipeline_mode<synchronous>, transform_indices = @transform_1, window_bounds = array<i64: 128, 384>}, {transform_indices = @transform_2, window_bounds = array<i64: 1, 8, 128>}]} {
    %c8_i32 = arith.constant 8 : i32
    %0 = arith.muli %arg1, %c8_i32 : i32
    %1 = tpu.assume_multiple %0, 8 : i32
    %c0 = arith.constant 0 : index
    %c0_0 = arith.constant 0 : index
    %c0_1 = arith.constant 0 : index
    %2 = vector.load %arg2[%c0, %c0_0, %c0_1] : memref<1x8x128xbf16, #tpu.memory_space<vmem>>, vector<1x8x128xbf16>
    %3 = vector.shape_cast %2 : vector<1x8x128xbf16> to vector<8x128xbf16>
    %c0_2 = arith.constant 0 : index
    %c0_3 = arith.constant 0 : index
    %4 = vector.load %arg3[%c0_2, %c0_3] : memref<128x384xbf16, #tpu.memory_space<vmem>>, vector<128x384xbf16>
    %cst = arith.constant dense<0.000000e+00> : vector<8x384xf32>
    %5 = tpu.matmul %3, %4, %cst {dimension_numbers = #tpu.dot_dimension_numbers<[1], [0], [0], [1], [0, 0, 1, 1], [], []>} : vector<8x128xbf16>, vector<128x384xbf16>, vector<8x384xf32> -> vector<8x384xf32>
    %6 = vector.extract_strided_slice %5 {offsets = [0, 0], sizes = [8, 128], strides = [1, 1]} : vector<8x384xf32> to vector<8x128xf32>
    %cst_4 = arith.constant 0.707106769 : f32
    %7 = vector.broadcast %cst_4 : f32 to vector<8x128xf32>
    %8 = arith.mulf %6, %7 : vector<8x128xf32>
    %9 = arith.truncf %8 : vector<8x128xf32> to vector<8x128xbf16>
    %c0_5 = arith.constant 0 : index
    %c0_6 = arith.constant 0 : index
    %c0_7 = arith.constant 0 : index
    %10 = vector.load %arg5[%c0_5, %c0_6, %c0_7] : memref<1x8x128xbf16, #tpu.memory_space<vmem>>, vector<1x8x128xbf16>
    %11 = vector.shape_cast %10 : vector<1x8x128xbf16> to vector<8x128xbf16>
    %12 = vector.shape_cast %9 : vector<8x128xbf16> to vector<1x8x128xbf16>
    tpu.vector_store %arg5[%c0_5, %c0_6, %c0_7], %12 {strides = array<i32>} : memref<1x8x128xbf16, #tpu.memory_space<vmem>>, vector<1x8x128xbf16>,
    %13 = vector.extract_strided_slice %5 {offsets = [0, 128], sizes = [8, 128], strides = [1, 1]} : vector<8x384xf32> to vector<8x128xf32>
    %14 = arith.truncf %13 : vector<8x128xf32> to vector<8x128xbf16>
    %c0_8 = arith.constant 0 : index
    %c0_9 = arith.constant 0 : index
    %c0_10 = arith.constant 0 : index
    %15 = vector.load %arg6[%c0_8, %c0_9, %c0_10] : memref<1x8x128xbf16, #tpu.memory_space<vmem>>, vector<1x8x128xbf16>
    %16 = vector.shape_cast %15 : vector<1x8x128xbf16> to vector<8x128xbf16>
    %17 = vector.shape_cast %14 : vector<8x128xbf16> to vector<1x8x128xbf16>
    tpu.vector_store %arg6[%c0_8, %c0_9, %c0_10], %17 {strides = array<i32>} : memref<1x8x128xbf16, #tpu.memory_space<vmem>>, vector<1x8x128xbf16>,
    %18 = vector.extract_strided_slice %5 {offsets = [0, 256], sizes = [8, 128], strides = [1, 1]} : vector<8x384xf32> to vector<8x128xf32>
    %19 = arith.truncf %18 : vector<8x128xf32> to vector<8x128xbf16>
    %c0_11 = arith.constant 0 : index
    %c0_12 = arith.constant 0 : index
    %c0_13 = arith.constant 0 : index
    %20 = vector.load %arg7[%c0_11, %c0_12, %c0_13] : memref<1x8x128xbf16, #tpu.memory_space<vmem>>, vector<1x8x128xbf16>
    %21 = vector.shape_cast %20 : vector<1x8x128xbf16> to vector<8x128xbf16>
    %22 = vector.shape_cast %19 : vector<8x128xbf16> to vector<1x8x128xbf16>
    tpu.vector_store %arg7[%c0_11, %c0_12, %c0_13], %22 {strides = array<i32>} : memref<1x8x128xbf16, #tpu.memory_space<vmem>>, vector<1x8x128xbf16>,
    %23 = tpu.iota {dimensions = array<i32: 0>} : vector<8x8xi32>
    %24 = vector.broadcast %1 : i32 to vector<8x8xi32>
    %25 = arith.addi %24, %23 : vector<8x8xi32>
    %26 = tpu.iota {dimensions = array<i32: 1>} : vector<8x8xi32>
    %27 = arith.cmpi sgt, %26, %25 : vector<8x8xi32>
    %c6_i32 = arith.constant 6 : i32
    %28 = vector.broadcast %c6_i32 : i32 to vector<8x8xi32>
    %29 = arith.cmpi sge, %26, %28 : vector<8x8xi32>
    %30 = arith.ori %27, %29 : vector<8x8xi1>
    %cst_14 = arith.constant -1.000000e+30 : f32
    %c0_i32 = arith.constant 0 : i32
    %31 = arith.index_cast %c0_i32 : i32 to index
    %c0_15 = arith.constant 0 : index
    %c0_16 = arith.constant 0 : index
    %32 = vector.load %arg5[%31, %c0_15, %c0_16] : memref<1x8x128xbf16, #tpu.memory_space<vmem>>, vector<1x8x128xbf16>
    %33 = vector.shape_cast %32 : vector<1x8x128xbf16> to vector<8x128xbf16>
    %34 = arith.index_cast %c0_i32 : i32 to index
    %c0_17 = arith.constant 0 : index
    %c0_18 = arith.constant 0 : index
    %35 = vector.load %arg6[%34, %c0_17, %c0_18] : memref<1x8x128xbf16, #tpu.memory_space<vmem>>, vector<1x8x128xbf16>
    %36 = vector.shape_cast %35 : vector<1x8x128xbf16> to vector<8x128xbf16>
    %37 = arith.index_cast %c0_i32 : i32 to index
    %c0_19 = arith.constant 0 : index
    %c0_20 = arith.constant 0 : index
    %38 = vector.load %arg7[%37, %c0_19, %c0_20] : memref<1x8x128xbf16, #tpu.memory_space<vmem>>, vector<1x8x128xbf16>
    %39 = vector.shape_cast %38 : vector<1x8x128xbf16> to vector<8x128xbf16>
    %cst_21 = arith.constant dense<0.000000e+00> : vector<8x8xf32>
    %40 = tpu.matmul %33, %36, %cst_21 {dimension_numbers = #tpu.dot_dimension_numbers<[1], [1], [0], [0], [0, 0, 1, 0], [], []>} : vector<8x128xbf16>, vector<8x128xbf16>, vector<8x8xf32> -> vector<8x8xf32>
    %41 = vector.broadcast %cst_14 : f32 to vector<8x8xf32>
    %42 = arith.select %30, %41, %40 : vector<8x8xi1>, vector<8x8xf32>
    %cst_22 = arith.constant dense<0xFF800000> : vector<8xf32>
    %43 = vector.multi_reduction <maximumf>, %42, %cst_22 [1] : vector<8x8xf32> to vector<8xf32>
    %44 = vector.shape_cast %43 : vector<8xf32> to vector<8x1xf32>
    %45 = vector.broadcast %44 : vector<8x1xf32> to vector<8x8xf32>
    %46 = arith.subf %42, %45 : vector<8x8xf32>
    %47 = math.exp %46 : vector<8x8xf32>
    %cst_23 = arith.constant dense<0.000000e+00> : vector<8xf32>
    %48 = vector.multi_reduction <add>, %47, %cst_23 [1] : vector<8x8xf32> to vector<8xf32>
    %49 = vector.shape_cast %48 : vector<8xf32> to vector<8x1xf32>
    %50 = tpu.reciprocal %49 {approx = true} : vector<8x1xf32> -> vector<8x1xf32>
    %51 = vector.broadcast %50 : vector<8x1xf32> to vector<8x8xf32>
    %52 = arith.mulf %47, %51 : vector<8x8xf32>
    %53 = arith.truncf %52 : vector<8x8xf32> to vector<8x8xbf16>
    %cst_24 = arith.constant dense<0.000000e+00> : vector<8x128xf32>
    %54 = tpu.matmul %53, %39, %cst_24 {dimension_numbers = #tpu.dot_dimension_numbers<[1], [0], [0], [1], [0, 0, 1, 1], [], []>} : vector<8x8xbf16>, vector<8x128xbf16>, vector<8x128xf32> -> vector<8x128xf32>
    %55 = arith.index_cast %c0_i32 : i32 to index
    %c0_25 = arith.constant 0 : index
    %c0_26 = arith.constant 0 : index
    %56 = vector.load %arg4[%55, %c0_25, %c0_26] : memref<1x8x128xf32, #tpu.memory_space<vmem>>, vector<1x8x128xf32>
    %57 = vector.shape_cast %56 : vector<1x8x128xf32> to vector<8x128xf32>
    %58 = vector.shape_cast %54 : vector<8x128xf32> to vector<1x8x128xf32>
    tpu.vector_store %arg4[%55, %c0_25, %c0_26], %58 {strides = array<i32>} : memref<1x8x128xf32, #tpu.memory_space<vmem>>, vector<1x8x128xf32>,
    %c1_i32 = arith.constant 1 : i32
    return
  }
  func.func @transform_0(%arg0: i32, %arg1: i32) -> (i32, i32, i32) {
    %c0_i32 = arith.constant 0 : i32
    %c0_i32_0 = arith.constant 0 : i32
    %c0_i32_1 = arith.constant 0 : i32
    return %arg0, %c0_i32, %c0_i32_0 : i32, i32, i32
  }
  func.func @transform_1(%arg0: i32, %arg1: i32) -> (i32, i32) {
    %c0_i32 = arith.constant 0 : i32
    %c0_i32_0 = arith.constant 0 : i32
    %c0_i32_1 = arith.constant 0 : i32
    return %c0_i32, %c0_i32_0 : i32, i32
  }
  func.func @transform_2(%arg0: i32, %arg1: i32) -> (i32, i32, i32) {
    %c0_i32 = arith.constant 0 : i32
    %c0_i32_0 = arith.constant 0 : i32
    return %arg0, %arg1, %c0_i32 : i32, i32, i32
  }
}

</mosaic_0001>

<llo_original>
// kernel: tpu_custom_call.1
$region0: #{tpu_custom_call.1}
  #allocation0 [shape = 'u32[]', space=smem, size = 0x4, offset = 0x4, fixed_abs, tag = 'smem constant byte address 0x4 - core index']
  #allocation1 [shape = 'u32[144,128]{1,0:T(1,128)}', space=vmem, size = 0x12000, scoped, tag = 'internal scratch']
  #allocation2 [shape = 'bf16[1,8,128]{2,1,0:T(8,128)(2,1)}', space=vmem, size = 0x800, scoped, tag = 'scratch operand']
  #allocation3 [shape = 'bf16[1,8,128]{2,1,0:T(8,128)(2,1)}', space=vmem, size = 0x800, scoped, tag = 'scratch operand']
  #allocation4 [shape = 'bf16[1,8,128]{2,1,0:T(8,128)(2,1)}', space=vmem, size = 0x800, scoped, tag = 'scratch operand']
  %s0 = inlined_call_operand.hbm [shape: bf16[2,8,128], index: 0, kind: input, shape index: {}]
  %s1 = inlined_call_operand.hbm [shape: bf16[128,384], index: 1, kind: input, shape index: {}]
  %s2 = inlined_call_operand.hbm [shape: f32[2,8,128], index: 2, kind: output, shape index: {}]
  %s3 = sld [smem:[#allocation0]]
  $region49: #{tpu_custom_call.1} parent=0
    _
  %s5 = ssub.s32 1, %s3
  %s6 = scalar_select 0, %s5, %s3
  $region1: #{tpu_custom_call.1} parent=0
    #allocation5 [shape = 'u8[4096]{0}', space=vmem, size = 0x1000, scoped, tag = 'input window, operand 0']
    #allocation6 [shape = 's32[2]{0}', space=sflag, size = 0x8, scoped, tag = 'scoped memory for tpu_custom_call.1']
    #allocation7 [shape = 's32[2]{0}', space=sflag, size = 0x8, scoped, tag = 'scoped memory for tpu_custom_call.1']
    #allocation8 [shape = 'u8[98304]{0}', space=vmem, size = 0x18000, scoped, tag = 'input window, operand 1, single buffered']
    #allocation9 [shape = 's32[1]{0}', space=sflag, size = 0x4, scoped, tag = 'scoped memory for tpu_custom_call.1']
    #allocation10 [shape = 'u8[8192]{0}', space=vmem, size = 0x2000, scoped, tag = 'output window, operand 0']
    %7 = vsyncpa [#allocation6], 0
    %s8 = scalar_lea.sflag [#allocation6], 1
    %9 = vsyncpa %s8, 0
    %10 = vsyncpa [#allocation9], 0
    %11 = vsyncpa [#allocation7], 0
    %s12 = scalar_lea.sflag [#allocation7], 1
    %13 = vsyncpa %s12, 0
    loop: start=0, step=1, limit=4
    $region2: #{tpu_custom_call.1} parent=1 // loop_pre_header
      _
    $region3: #{tpu_custom_call.1} parent=1 // loop_header
      %s15 = sphi 0, %s19
      %p16 = scmp.ge.s32.totalorder %s15, 4
      %s22 = sphi 0, %s34
      %s23 = sphi 0, %s30
      %s24 = sphi 0, %s22
      %s25 = sphi 0, %s23
      %s26 = sphi 0, %s24
      %s27 = sphi 0, %s25
      %s37 = sphi 0, %s39
      %s40 = sphi 0, %s37
      %s41 = sphi 0, %s40
      %s57 = sphi 0, %s41
      %s61 = sphi 0, %s61
      %s63 = sphi 0, %s61
      %s64 = sphi 0, %s63
      %s78 = sphi 0, %s64
      %s86 = sphi 0, %s88
      %s89 = sphi 0, %s86
      %s90 = sphi 0, %s89
      %s106 = sphi 0, %s90
    $region4: #{tpu_custom_call.1} parent=1 // loop_header_branch
      %18 = sbr.rel (%p16) target = $region8
    $region5: #{tpu_custom_call.1} parent=1 // loop_body
      %s20 = ssub.s32 %s15, 1
      %s21 = ssub.s32 %s15, 2
      %s28 = sadd.s32 1, %s23
      %p29 = scmp.ge.s32.totalorder %s28, 1
      %s30 = scalar_select %p29, 0, %s28
      %s31 = sadd.s32 1, %s22
      %s32 = scalar_select %p29, %s31, %s22
      %p33 = scmp.ge.s32.totalorder %s32, 2
      %s34 = scalar_select %p33, 0, %s32
      %s35 = ssub.s32 %s22, %s34
      %p36 = scmp.eq.s32.totalorder %s35, 0
      %s38 = sadd.s32 %s37, 1
      %s39 = scalar_select %p36, %s37, %s38
      %p42 = pneg %p36
      %p43 = scmp.eq.s32.totalorder %s15, 1
      %p44 = por %p42, %p43
      %p45 = scmp.ne.s32.totalorder %s37, %s40
      %p46 = scmp.eq.s32.totalorder %s15, 0
      %p47 = por %p45, %p46
      %p48 = scmp.ne.s32.totalorder %s37, %s40
      %p49 = scmp.eq.s32.totalorder %s20, 1
      %p50 = por %p48, %p49
      %p51 = scmp.ne.s32.totalorder %s40, %s41
      %p52 = scmp.eq.s32.totalorder %s20, 0
      %p53 = por %p51, %p52
      %p54 = scmp.ne.s32.totalorder %s40, %s41
      %p55 = scmp.eq.s32.totalorder %s21, 1
      %p56 = por %p54, %p55
      %p58 = scmp.ne.s32.totalorder %s41, %s57
      %p59 = scmp.eq.s32.totalorder %s21, 0
      %p60 = por %p58, %p59
      %s62 = sadd.s32 %s61, 1
      %p65 = scmp.eq.s32.totalorder %s15, 1
      %p66 = scmp.ne.s32.totalorder %s61, %s63
      %p67 = scmp.eq.s32.totalorder %s15, 0
      %p68 = por %p66, %p67
      %p69 = scmp.ne.s32.totalorder %s61, %s63
      %p70 = scmp.eq.s32.totalorder %s20, 1
      %p71 = por %p69, %p70
      %p72 = scmp.ne.s32.totalorder %s63, %s64
      %p73 = scmp.eq.s32.totalorder %s20, 0
      %p74 = por %p72, %p73
      %p75 = scmp.ne.s32.totalorder %s63, %s64
      %p76 = scmp.eq.s32.totalorder %s21, 1
      %p77 = por %p75, %p76
      %p79 = scmp.ne.s32.totalorder %s64, %s78
      %p80 = scmp.eq.s32.totalorder %s21, 0
      %p81 = por %p79, %p80
      %s82 = ssub.s32 %s22, %s34
      %s83 = ssub.s32 %s23, %s30
      %s84 = sor.u32 %s82, %s83
      %p85 = scmp.eq.s32.totalorder %s84, 0
      %s87 = sadd.s32 %s86, 1
      %s88 = scalar_select %p85, %s86, %s87
      %p91 = pneg %p85
      %p92 = scmp.eq.s32.totalorder %s15, 1
      %p93 = por %p91, %p92
      %p94 = scmp.ne.s32.totalorder %s86, %s89
      %p95 = scmp.eq.s32.totalorder %s15, 0
      %p96 = por %p94, %p95
      %p97 = scmp.ne.s32.totalorder %s86, %s89
      %p98 = scmp.eq.s32.totalorder %s20, 1
      %p99 = por %p97, %p98
      %p100 = scmp.ne.s32.totalorder %s89, %s90
      %p101 = scmp.eq.s32.totalorder %s20, 0
      %p102 = por %p100, %p101
      %p103 = scmp.ne.s32.totalorder %s89, %s90
      %p104 = scmp.eq.s32.totalorder %s21, 1
      %p105 = por %p103, %p104
      %p107 = scmp.ne.s32.totalorder %s90, %s106
      %p108 = scmp.eq.s32.totalorder %s21, 0
      %p109 = por %p107, %p108
      %p110 = scmp.le.s32.totalorder 1, %s15
      %p111 = scmp.lt.s32.totalorder %s15, 3
      %p112 = pnand %p110, %p111
      %p113 = pneg %p112
      // Predicated region
      $region9: #{tpu_custom_call.1} parent=5 // pred_check
        _
      $region10: #{tpu_custom_call.1} parent=5 // pred_check_branch
        %115 = sbr.rel (%p112) target = $region12
      $region11: #{tpu_custom_call.1} parent=5 // pred_region
        %s116 = ssub.s32 %s15, 1
        // Predicated region
        $region13: #{tpu_custom_call.1} parent=11 // pred_check
          %p117 = pneg %p74
        $region14: #{tpu_custom_call.1} parent=11 // pred_check_branch
          %119 = sbr.rel (%p117) target = $region16
        $region15: #{tpu_custom_call.1} parent=11 // pred_region
          %s121 = ssub.s32 3072, 3072
          %122 = vsyncadd [#allocation9], %s121
          %s123 = sshll.u32 [#allocation8], 4
          %s124 = int_to_ptr.vmem [resolvable:$true] %s123
          %129 = dma.hbm_to_vmem [thread:$0]  %s1, 3072, %s124, [#allocation9], 192, 192, 12
        $region16: #{tpu_custom_call.1} parent=11 // pred_fallthru
          _
      $region12: #{tpu_custom_call.1} parent=5 // pred_fallthru
        _
      %p130 = scmp.lt.s32.totalorder %s15, 2
      // Predicated region
      $region17: #{tpu_custom_call.1} parent=5 // pred_check
        %p131 = pneg %p130
      $region18: #{tpu_custom_call.1} parent=5 // pred_check_branch
        %133 = sbr.rel (%p131) target = $region20
      $region19: #{tpu_custom_call.1} parent=5 // pred_region
        // Predicated region
        $region21: #{tpu_custom_call.1} parent=19 // pred_check
          %p134 = pneg %p47
        $region22: #{tpu_custom_call.1} parent=19 // pred_check_branch
          %136 = sbr.rel (%p134) target = $region24
        $region23: #{tpu_custom_call.1} parent=19 // pred_region
          %s137 = sand.u32 %s37, 1
          %s138 = scalar_lea.sflag [#allocation6], %s137
          %s139 = sand.u32 %s37, 1
          %s140 = smul.addr %s139, 4
          %s141 = scalar_lea.vmem [#allocation5], %s140
          %s143 = ssub.s32 64, 64
          %144 = vsyncadd %s138, %s143
          %s145 = smul.addr %s22, 64
          %s146 = scalar_lea.hbm %s0, %s145
          %s148 = sshll.u32 %s141, 4
          %s149 = int_to_ptr.vmem [resolvable:$true] %s148
          %151 = dma.hbm_to_vmem [thread:$0]  %s146, 64, %s149, %s138
        $region24: #{tpu_custom_call.1} parent=19 // pred_fallthru
          _
      $region20: #{tpu_custom_call.1} parent=5 // pred_fallthru
        _
      %p152 = scmp.le.s32.totalorder 1, %s15
      %p153 = scmp.lt.s32.totalorder %s15, 3
      %p154 = pnand %p152, %p153
      %p155 = pneg %p154
      // Predicated region
      $region25: #{tpu_custom_call.1} parent=5 // pred_check
        _
      $region26: #{tpu_custom_call.1} parent=5 // pred_check_branch
        %157 = sbr.rel (%p154) target = $region28
      $region27: #{tpu_custom_call.1} parent=5 // pred_region
        %s158 = ssub.s32 %s15, 1
        %s159 = sand.u32 %s40, 1
        %s160 = scalar_lea.sflag [#allocation6], %s159
        %s161 = sand.u32 %s40, 1
        %s162 = smul.addr %s161, 4
        %s163 = scalar_lea.vmem [#allocation5], %s162
        // Predicated region
        $region29: #{tpu_custom_call.1} parent=27 // pred_check
          %p164 = pneg %p53
        $region30: #{tpu_custom_call.1} parent=27 // pred_check_branch
          %166 = sbr.rel (%p164) target = $region32
        $region31: #{tpu_custom_call.1} parent=27 // pred_region
          %167 = dma.done %s160, 64
        $region32: #{tpu_custom_call.1} parent=27 // pred_fallthru
          _
        // Predicated region
        $region33: #{tpu_custom_call.1} parent=27 // pred_check
          %p168 = pneg %p74
        $region34: #{tpu_custom_call.1} parent=27 // pred_check_branch
          %170 = sbr.rel (%p168) target = $region36
        $region35: #{tpu_custom_call.1} parent=27 // pred_region
          %171 = dma.done [#allocation9], 3072
        $region36: #{tpu_custom_call.1} parent=27 // pred_fallthru
          _
        %s172 = sand.u32 %s40, 1
        %s173 = scalar_lea.sflag [#allocation6], %s172
        %s174 = sand.u32 %s40, 1
        %s175 = smul.addr %s174, 4
        %s176 = scalar_lea.vmem [#allocation5], %s175
        %p177 = pneg %p53
        %p178 = pneg %p50
        %p179 = pneg %p74
        %p180 = pneg %p71
        %p181 = pneg %p102
        %p182 = pneg %p99
        %s183 = sand.u32 %s89, 1
        %s184 = scalar_lea.sflag [#allocation7], %s183
        %s185 = sand.u32 %s89, 1
        %s186 = smul.addr %s185, 8
        %s187 = scalar_lea.vmem [#allocation10], %s186
        %s189 = smul.u32 %s25, 8
        %v190 = vld [vmem:[%s163] sm:$0xf]
        %v191 = vld [vmem:[#allocation8] sm:$0xff]
        %v192 = vld [vmem:[#allocation8 + $0x8] sm:$0xf]
        %v193 = vld [vmem:[#allocation8 + $0xc] sm:$0xff]
        %v194 = vld [vmem:[#allocation8 + $0x14] sm:$0xf]
        %v195 = vld [vmem:[#allocation8 + $0x18] sm:$0xff]
        %v196 = vld [vmem:[#allocation8 + $0x20] sm:$0xf]
        %v197 = vld [vmem:[#allocation8 + $0x24] sm:$0xff]
        %v198 = vld [vmem:[#allocation8 + $0x2c] sm:$0xf]
        %v199 = vld [vmem:[#allocation8 + $0x30] sm:$0xff]
        %v200 = vld [vmem:[#allocation8 + $0x38] sm:$0xf]
        %v201 = vld [vmem:[#allocation8 + $0x3c] sm:$0xff]
        %v202 = vld [vmem:[#allocation8 + $0x44] sm:$0xf]
        %v203 = vld [vmem:[#allocation8 + $0x48] sm:$0xff]
        %v204 = vld [vmem:[#allocation8 + $0x50] sm:$0xf]
        %v205 = vld [vmem:[#allocation8 + $0x54] sm:$0xff]
        %v206 = vld [vmem:[#allocation8 + $0x5c] sm:$0xf]
        %v207 = vld [vmem:[#allocation8 + $0x60] sm:$0xff]
        %v208 = vld [vmem:[#allocation8 + $0x68] sm:$0xf]
        %v209 = vld [vmem:[#allocation8 + $0x6c] sm:$0xff]
        %v210 = vld [vmem:[#allocation8 + $0x74] sm:$0xf]
        %v211 = vld [vmem:[#allocation8 + $0x78] sm:$0xff]
        %v212 = vld [vmem:[#allocation8 + $0x80] sm:$0xf]
        %v213 = vld [vmem:[#allocation8 + $0x84] sm:$0xff]
        %v214 = vld [vmem:[#allocation8 + $0x8c] sm:$0xf]
        %v215 = vld [vmem:[#allocation8 + $0x90] sm:$0xff]
        %v216 = vld [vmem:[#allocation8 + $0x98] sm:$0xf]
        %v217 = vld [vmem:[#allocation8 + $0x9c] sm:$0xff]
        %v218 = vld [vmem:[#allocation8 + $0xa4] sm:$0xf]
        %v219 = vld [vmem:[#allocation8 + $0xa8] sm:$0xff]
        %v220 = vld [vmem:[#allocation8 + $0xb0] sm:$0xf]
        %v221 = vld [vmem:[#allocation8 + $0xb4] sm:$0xff]
        %v222 = vld [vmem:[#allocation8 + $0xbc] sm:$0xf]
        %v255 = vunpack.c.l.b16 %v191
        %v256 = vunpack.c.h.b16 %v191
        %v257 = vunpack.c.l.b16 %v192
        %v258 = vunpack.c.l.b16 %v193
        %v259 = vunpack.c.h.b16 %v193
        %v260 = vunpack.c.l.b16 %v194
        %v261 = vunpack.c.l.b16 %v195
        %v262 = vunpack.c.h.b16 %v195
        %v263 = vunpack.c.l.b16 %v196
        %v264 = vunpack.c.l.b16 %v197
        %v265 = vunpack.c.h.b16 %v197
        %v266 = vunpack.c.l.b16 %v198
        %v267 = vunpack.c.l.b16 %v199
        %v268 = vunpack.c.h.b16 %v199
        %v269 = vunpack.c.l.b16 %v200
        %v270 = vunpack.c.l.b16 %v201
        %v271 = vunpack.c.h.b16 %v201
        %v272 = vunpack.c.l.b16 %v202
        %v273 = vunpack.c.l.b16 %v203
        %v274 = vunpack.c.h.b16 %v203
        %v275 = vunpack.c.l.b16 %v204
        %v276 = vunpack.c.l.b16 %v205
        %v277 = vunpack.c.h.b16 %v205
        %v278 = vunpack.c.l.b16 %v206
        %v279 = vunpack.c.l.b16 %v207
        %v280 = vunpack.c.h.b16 %v207
        %v281 = vunpack.c.l.b16 %v208
        %v282 = vunpack.c.l.b16 %v209
        %v283 = vunpack.c.h.b16 %v209
        %v284 = vunpack.c.l.b16 %v210
        %v285 = vunpack.c.l.b16 %v211
        %v286 = vunpack.c.h.b16 %v211
        %v287 = vunpack.c.l.b16 %v212
        %v288 = vunpack.c.l.b16 %v213
        %v289 = vunpack.c.h.b16 %v213
        %v290 = vunpack.c.l.b16 %v214
        %v291 = vunpack.c.l.b16 %v215
        %v292 = vunpack.c.h.b16 %v215
        %v293 = vunpack.c.l.b16 %v216
        %v294 = vunpack.c.l.b16 %v217
        %v295 = vunpack.c.h.b16 %v217
        %v296 = vunpack.c.l.b16 %v218
        %v297 = vunpack.c.l.b16 %v219
        %v298 = vunpack.c.h.b16 %v219
        %v299 = vunpack.c.l.b16 %v220
        %v300 = vunpack.c.l.b16 %v221
        %v301 = vunpack.c.h.b16 %v221
        %v302 = vunpack.c.l.b16 %v222
        %v303 = vpack.c.b16 %v258, %v255
        %v304 = vpack.c.b16 %v259, %v256
        %v305 = vpack.c.b16 %v260, %v257
        %v306 = vpack.c.b16 %v264, %v261
        %v307 = vpack.c.b16 %v265, %v262
        %v308 = vpack.c.b16 %v266, %v263
        %v309 = vpack.c.b16 %v270, %v267
        %v310 = vpack.c.b16 %v271, %v268
        %v311 = vpack.c.b16 %v272, %v269
        %v312 = vpack.c.b16 %v276, %v273
        %v313 = vpack.c.b16 %v277, %v274
        %v314 = vpack.c.b16 %v278, %v275
        %v315 = vpack.c.b16 %v282, %v279
        %v316 = vpack.c.b16 %v283, %v280
        %v317 = vpack.c.b16 %v284, %v281
        %v318 = vpack.c.b16 %v288, %v285
        %v319 = vpack.c.b16 %v289, %v286
        %v320 = vpack.c.b16 %v290, %v287
        %v321 = vpack.c.b16 %v294, %v291
        %v322 = vpack.c.b16 %v295, %v292
        %v323 = vpack.c.b16 %v296, %v293
        %v324 = vpack.c.b16 %v300, %v297
        %v325 = vpack.c.b16 %v301, %v298
        %v326 = vpack.c.b16 %v302, %v299
        %351 = vmatprep.subr.bf16.mxu0 %v325
        %352 = vmatpush1.bf16.msra.mxu0 %v324
        %353 = vmatprep.subr.bf16.mxu0 %v322
        %354 = vmatpush1.bf16.msra.mxu0 %v321
        %355 = vmatprep.subr.bf16.mxu0 %v319
        %356 = vmatpush1.bf16.msra.mxu0 %v318
        %357 = vmatprep.subr.bf16.mxu0 %v316
        %358 = vmatpush1.bf16.msra.mxu0 %v315
        %359 = vmatprep.subr.bf16.mxu0 %v313
        %360 = vmatpush1.bf16.msra.mxu0 %v312
        %361 = vmatprep.subr.bf16.mxu0 %v310
        %362 = vmatpush1.bf16.msra.mxu0 %v309
        %363 = vmatprep.subr.bf16.mxu0 %v307
        %364 = vmatpush1.bf16.msra.mxu0 %v306
        %365 = vmatprep.subr.bf16.mxu0 %v304
        %366 = vmatpush1.bf16.msra.mxu0 %v303
        %367 = vmatprep.subr.bf16.mxu0 0
        %368 = vmatpush2.bf16.msra.mxu0 0
        %369 = vmatprep.subr.bf16.mxu0 0
        %370 = vmatpush2.bf16.msra.mxu0 0
        %371 = vmatprep.subr.bf16.mxu0 0
        %372 = vmatpush2.bf16.msra.mxu0 0
        %373 = vmatprep.subr.bf16.mxu0 0
        %374 = vmatpush2.bf16.msra.mxu0 0
        %375 = vmatprep.subr.bf16.mxu0 0
        %376 = vmatpush2.bf16.msra.mxu0 0
        %377 = vmatprep.subr.bf16.mxu0 0
        %378 = vmatpush2.bf16.msra.mxu0 0
        %379 = vmatprep.subr.bf16.mxu0 0
        %380 = vmatpush2.bf16.msra.mxu0 0
        %381 = vmatprep.subr.bf16.mxu0 0
        %382 = vmatpush2.bf16.msra.mxu0 0
        %383 = vmatprep.mubr.bf16.mxu0 0
        %384 = vmatmul.mubr.bf16.gmra.mxu0 %v190
        %v385 = vpop.f32.mrf.mxu0
        %v386 = vadd.f32 0.0, %v385
        %v387 = vpop.f32.mrf.mxu0
        %v388 = vadd.f32 0.0, %v387
        %v389 = vpop.f32.mrf.mxu0
        %v390 = vpop.f32.mrf.mxu0
        %391 = vdwg.mxu0
        %392 = vmatprep.subr.bf16.mxu0 0
        %393 = vmatpush1.bf16.msra.mxu0 %v326
        %394 = vmatprep.subr.bf16.mxu0 0
        %395 = vmatpush1.bf16.msra.mxu0 %v323
        %396 = vmatprep.subr.bf16.mxu0 0
        %397 = vmatpush1.bf16.msra.mxu0 %v320
        %398 = vmatprep.subr.bf16.mxu0 0
        %399 = vmatpush1.bf16.msra.mxu0 %v317
        %400 = vmatprep.subr.bf16.mxu0 0
        %401 = vmatpush1.bf16.msra.mxu0 %v314
        %402 = vmatprep.subr.bf16.mxu0 0
        %403 = vmatpush1.bf16.msra.mxu0 %v311
        %404 = vmatprep.subr.bf16.mxu0 0
        %405 = vmatpush1.bf16.msra.mxu0 %v308
        %406 = vmatprep.subr.bf16.mxu0 0
        %407 = vmatpush1.bf16.msra.mxu0 %v305
        %408 = vmatprep.subr.bf16.mxu0 0
        %409 = vmatpush2.bf16.msra.mxu0 0
        %410 = vmatprep.subr.bf16.mxu0 0
        %411 = vmatpush2.bf16.msra.mxu0 0
        %412 = vmatprep.subr.bf16.mxu0 0
        %413 = vmatpush2.bf16.msra.mxu0 0
        %414 = vmatprep.subr.bf16.mxu0 0
        %415 = vmatpush2.bf16.msra.mxu0 0
        %416 = vmatprep.subr.bf16.mxu0 0
        %417 = vmatpush2.bf16.msra.mxu0 0
        %418 = vmatprep.subr.bf16.mxu0 0
        %419 = vmatpush2.bf16.msra.mxu0 0
        %420 = vmatprep.subr.bf16.mxu0 0
        %421 = vmatpush2.bf16.msra.mxu0 0
        %422 = vmatprep.subr.bf16.mxu0 0
        %423 = vmatpush2.bf16.msra.mxu0 0
        %424 = vmatprep.mubr.bf16.mxu0 0
        %425 = vmatmul.mubr.bf16.gmra.mxu0 %v190
        %v426 = vpop.f32.mrf.mxu0
        %v427 = vadd.f32 0.0, %v426
        %v428 = vpop.f32.mrf.mxu0
        %v429 = vpop.f32.mrf.mxu0
        %v430 = vpop.f32.mrf.mxu0
        %431 = vdwg.mxu0
        %v432 = vmul.f32 %v386, 0.70710677
        %v433 = vpack.c.bf16 %v432, %v432
        %434 = vst [vmem:[#allocation2] sm:$0xf] %v433
        %v435 = vpack.c.bf16 %v388, %v388
        %436 = vst [vmem:[#allocation3] sm:$0xf] %v435
        %v437 = vpack.c.bf16 %v427, %v427
        %438 = vst [vmem:[#allocation4] sm:$0xf] %v437
        %v439 = vlaneseq
        %v440 = vshrl.u32 %v439, 7
        %v441 = vstv %s189
        %v442 = vadd.s32 %v441, %v440
        %v443 = vlaneseq
        %v444 = vand.u32 %v443, 127
        %vm445 = vcmp.gt.s32.totalorder %v444, %v442
        %vm446 = vcmp.ge.s32.totalorder %v444, 6
        %vm447 = vmor %vm445, %vm446
        %v448 = vld [vmem:[#allocation2] sm:$0xf]
        %v449 = vld [vmem:[#allocation3] sm:$0xf]
        %v450 = vld [vmem:[#allocation4] sm:$0xf]
        %451 = vmatprep.subr.bf16.mxu0 0
        %452 = vmatpush1.bf16.xpose.msra.mxu0 0
        %453 = vmatprep.subr.bf16.mxu0 0
        %454 = vmatpush1.bf16.xpose.msra.mxu0 0
        %455 = vmatprep.subr.bf16.mxu0 0
        %456 = vmatpush1.bf16.xpose.msra.mxu0 0
        %457 = vmatprep.subr.bf16.mxu0 0
        %458 = vmatpush1.bf16.xpose.msra.mxu0 0
        %459 = vmatprep.subr.bf16.mxu0 0
        %460 = vmatpush1.bf16.xpose.msra.mxu0 0
        %461 = vmatprep.subr.bf16.mxu0 0
        %462 = vmatpush1.bf16.xpose.msra.mxu0 0
        %463 = vmatprep.subr.bf16.mxu0 0
        %464 = vmatpush1.bf16.xpose.msra.mxu0 0
        %465 = vmatprep.subr.bf16.mxu0 0
        %466 = vmatpush1.bf16.xpose.msra.mxu0 %v449
        %467 = vmatprep.subr.bf16.mxu0 0
        %468 = vmatpush2.bf16.xpose.msra.mxu0 0
        %469 = vmatprep.subr.bf16.mxu0 0
        %470 = vmatpush2.bf16.xpose.msra.mxu0 0
        %471 = vmatprep.subr.bf16.mxu0 0
        %472 = vmatpush2.bf16.xpose.msra.mxu0 0
        %473 = vmatprep.subr.bf16.mxu0 0
        %474 = vmatpush2.bf16.xpose.msra.mxu0 0
        %475 = vmatprep.subr.bf16.mxu0 0
        %476 = vmatpush2.bf16.xpose.msra.mxu0 0
        %477 = vmatprep.subr.bf16.mxu0 0
        %478 = vmatpush2.bf16.xpose.msra.mxu0 0
        %479 = vmatprep.subr.bf16.mxu0 0
        %480 = vmatpush2.bf16.xpose.msra.mxu0 0
        %481 = vmatprep.subr.bf16.mxu0 0
        %482 = vmatpush2.bf16.xpose.msra.mxu0 0
        %483 = vmatprep.mubr.bf16.mxu0 0
        %484 = vmatmul.mubr.bf16.gmra.mxu0 %v448
        %v485 = vpop.f32.mrf.mxu0
        %v486 = vadd.f32 0.0, %v485
        %v487 = vpop.f32.mrf.mxu0
        %v488 = vpop.f32.mrf.mxu0
        %v489 = vpop.f32.mrf.mxu0
        %490 = vdwg.mxu0
        %v491 = vsel %vm447, -1e+30, %v486
        %vm492 = vcmask 64512
        %v493 = vsel %vm492, %v491, -inf
        %494 = vmax.xlane.f32.xlu0 %v493
        %v495 = vpop.xlane.xlu0 %494
        %v496 = vsub.f32 %v491, %v495
        %v497 = vmul.f32 %v496, 1.442695
        %v498 = vpow.pop %v497
        %v499 = vsel %vm492, %v498, 0.0
        %500 = vadd.xlane.f32.xlu0 %v499
        %v501 = vpop.xlane.xlu0 %500
        %v502 = vrcp.pop %v501
        %v503 = vmul.f32 %v498, %v502
        %v504 = vpack.c.bf16 %v503, %v503
        %v506 = vsel %vm492, %v504, 0
        %vm508 = vcmask 1043456
        %v510 = vsel %vm508, %v450, 0
        %512 = vmatprep.subr.bf16.mxu0 0
        %513 = vmatpush1.bf16.msra.mxu0 0
        %514 = vmatprep.subr.bf16.mxu0 0
        %515 = vmatpush1.bf16.msra.mxu0 0
        %516 = vmatprep.subr.bf16.mxu0 0
        %517 = vmatpush1.bf16.msra.mxu0 0
        %518 = vmatprep.subr.bf16.mxu0 0
        %519 = vmatpush1.bf16.msra.mxu0 0
        %520 = vmatprep.subr.bf16.mxu0 0
        %521 = vmatpush1.bf16.msra.mxu0 0
        %522 = vmatprep.subr.bf16.mxu0 0
        %523 = vmatpush1.bf16.msra.mxu0 0
        %524 = vmatprep.subr.bf16.mxu0 0
        %525 = vmatpush1.bf16.msra.mxu0 0
        %526 = vmatprep.subr.bf16.mxu0 0
        %527 = vmatpush1.bf16.msra.mxu0 %v510
        %528 = vmatprep.subr.bf16.mxu0 0
        %529 = vmatpush2.bf16.msra.mxu0 0
        %530 = vmatprep.subr.bf16.mxu0 0
        %531 = vmatpush2.bf16.msra.mxu0 0
        %532 = vmatprep.subr.bf16.mxu0 0
        %533 = vmatpush2.bf16.msra.mxu0 0
        %534 = vmatprep.subr.bf16.mxu0 0
        %535 = vmatpush2.bf16.msra.mxu0 0
        %536 = vmatprep.subr.bf16.mxu0 0
        %537 = vmatpush2.bf16.msra.mxu0 0
        %538 = vmatprep.subr.bf16.mxu0 0
        %539 = vmatpush2.bf16.msra.mxu0 0
        %540 = vmatprep.subr.bf16.mxu0 0
        %541 = vmatpush2.bf16.msra.mxu0 0
        %542 = vmatprep.subr.bf16.mxu0 0
        %543 = vmatpush2.bf16.msra.mxu0 0
        %544 = vmatprep.mubr.bf16.mxu0 0
        %545 = vmatmul.mubr.bf16.gmra.mxu0 %v506
        %v546 = vpop.f32.mrf.mxu0
        %v547 = vadd.f32 0.0, %v546
        %v548 = vpop.f32.mrf.mxu0
        %v549 = vpop.f32.mrf.mxu0
        %v550 = vpop.f32.mrf.mxu0
        %551 = vdwg.mxu0
        %552 = vst [vmem:[%s187] sm:$0xff] %v547
        %s553 = sand.u32 %s89, 1
        %s554 = scalar_lea.sflag [#allocation7], %s553
        %s555 = sand.u32 %s89, 1
        %s556 = smul.addr %s555, 8
        %s557 = scalar_lea.vmem [#allocation10], %s556
        // Predicated region
        $region37: #{tpu_custom_call.1} parent=27 // pred_check
          %p558 = pneg %p99
        $region38: #{tpu_custom_call.1} parent=27 // pred_check_branch
          %560 = sbr.rel (%p558) target = $region40
        $region39: #{tpu_custom_call.1} parent=27 // pred_region
          %s562 = ssub.s32 128, 128
          %563 = vsyncadd %s554, %s562
          %s564 = sadd.s32 %s25, %s24
          %s565 = smul.addr %s564, 128
          %s566 = scalar_lea.hbm %s2, %s565
          %s568 = sshll.u32 %s557, 4
          %s569 = int_to_ptr.vmem [resolvable:$true] %s568
          %571 = dma.vmem_to_hbm [thread:$0]  %s569, 128, %s566, %s554
        $region40: #{tpu_custom_call.1} parent=27 // pred_fallthru
          _
      $region28: #{tpu_custom_call.1} parent=5 // pred_fallthru
        _
      %p572 = scmp.le.s32.totalorder 2, %s15
      // Predicated region
      $region41: #{tpu_custom_call.1} parent=5 // pred_check
        %p573 = pneg %p572
      $region42: #{tpu_custom_call.1} parent=5 // pred_check_branch
        %575 = sbr.rel (%p573) target = $region44
      $region43: #{tpu_custom_call.1} parent=5 // pred_region
        %s576 = ssub.s32 %s15, 2
        // Predicated region
        $region45: #{tpu_custom_call.1} parent=43 // pred_check
          %p577 = pneg %p105
        $region46: #{tpu_custom_call.1} parent=43 // pred_check_branch
          %579 = sbr.rel (%p577) target = $region48
        $region47: #{tpu_custom_call.1} parent=43 // pred_region
          %s580 = sand.u32 %s90, 1
          %s581 = scalar_lea.sflag [#allocation7], %s580
          %s582 = sand.u32 %s90, 1
          %s583 = smul.addr %s582, 8
          %s584 = scalar_lea.vmem [#allocation10], %s583
          %585 = dma.done %s581, 128
        $region48: #{tpu_custom_call.1} parent=43 // pred_fallthru
          _
      $region44: #{tpu_custom_call.1} parent=5 // pred_fallthru
        _
    $region6: #{tpu_custom_call.1} parent=1 // loop_footer
      %s19 = sadd.s32 1, %s15
    $region7: #{tpu_custom_call.1} parent=1 // loop_footer_branch
      %14 = sbr.rel target = $region3
    $region8: #{tpu_custom_call.1} parent=1 // loop_exit
      _
    %586 = vsyncpa [#allocation6], 1
    %s587 = scalar_lea.sflag [#allocation6], 1
    %588 = vsyncpa %s587, 1
    %589 = vsyncpa [#allocation9], 1
    %590 = vsyncpa [#allocation7], 1
    %s591 = scalar_lea.sflag [#allocation7], 1
    %592 = vsyncpa %s591, 1

// kernel: tpu_custom_call.1
$region0: #{tpu_custom_call.1}
  #allocation0 [shape = 'u32[]', space=smem, size = 0x4, offset = 0x4, fixed_abs, tag = 'smem constant byte address 0x4 - core index']
  #allocation1 [shape = 'u32[144,128]{1,0:T(1,128)}', space=vmem, size = 0x12000, scoped, tag = 'internal scratch']
  #allocation2 [shape = 'bf16[1,8,128]{2,1,0:T(8,128)(2,1)}', space=vmem, size = 0x800, scoped, tag = 'scratch operand']
  #allocation3 [shape = 'bf16[1,8,128]{2,1,0:T(8,128)(2,1)}', space=vmem, size = 0x800, scoped, tag = 'scratch operand']
  #allocation4 [shape = 'bf16[1,8,128]{2,1,0:T(8,128)(2,1)}', space=vmem, size = 0x800, scoped, tag = 'scratch operand']
  %s0 = inlined_call_operand.hbm [shape: bf16[2,8,128], index: 0, kind: input, shape index: {}]
  %s1 = inlined_call_operand.hbm [shape: bf16[128,384], index: 1, kind: input, shape index: {}]
  %s2 = inlined_call_operand.hbm [shape: f32[2,8,128], index: 2, kind: output, shape index: {}]
  %s3 = sld [smem:[#allocation0]]
  $region49: #{tpu_custom_call.1} parent=0
    _
  %s5 = ssub.s32 1, %s3
  %s6 = scalar_select 0, %s5, %s3
  $region1: #{tpu_custom_call.1} parent=0
    #allocation5 [shape = 'u8[4096]{0}', space=vmem, size = 0x1000, scoped, tag = 'input window, operand 0']
    #allocation6 [shape = 's32[2]{0}', space=sflag, size = 0x8, scoped, tag = 'scoped memory for tpu_custom_call.1']
    #allocation7 [shape = 's32[2]{0}', space=sflag, size = 0x8, scoped, tag = 'scoped memory for tpu_custom_call.1']
    #allocation8 [shape = 'u8[98304]{0}', space=vmem, size = 0x18000, scoped, tag = 'input window, operand 1, single buffered']
    #allocation9 [shape = 's32[1]{0}', space=sflag, size = 0x4, scoped, tag = 'scoped memory for tpu_custom_call.1']
    #allocation10 [shape = 'u8[8192]{0}', space=vmem, size = 0x2000, scoped, tag = 'output window, operand 0']
    %7 = vsyncpa [#allocation6], 0
    %s8 = scalar_lea.sflag [#allocation6], 1
    %9 = vsyncpa %s8, 0
    %10 = vsyncpa [#allocation9], 0
    %11 = vsyncpa [#allocation7], 0
    %s12 = scalar_lea.sflag [#allocation7], 1
    %13 = vsyncpa %s12, 0
    loop: start=0, step=1, limit=4
    $region2: #{tpu_custom_call.1} parent=1 // loop_pre_header
      _
    $region3: #{tpu_custom_call.1} parent=1 // loop_header
      %s15 = sphi 0, %s19
      %p16 = scmp.ge.s32.totalorder %s15, 4
      %s22 = sphi 0, %s34
      %s23 = sphi 0, %s30
      %s24 = sphi 0, %s22
      %s25 = sphi 0, %s23
      %s26 = sphi 0, %s24
      %s27 = sphi 0, %s25
      %s37 = sphi 0, %s39
      %s40 = sphi 0, %s37
      %s41 = sphi 0, %s40
      %s57 = sphi 0, %s41
      %s61 = sphi 0, %s61
      %s63 = sphi 0, %s61
      %s64 = sphi 0, %s63
      %s78 = sphi 0, %s64
      %s86 = sphi 0, %s88
      %s89 = sphi 0, %s86
      %s90 = sphi 0, %s89
      %s106 = sphi 0, %s90
    $region4: #{tpu_custom_call.1} parent=1 // loop_header_branch
      %18 = sbr.rel (%p16) target = $region8
    $region5: #{tpu_custom_call.1} parent=1 // loop_body
      %s20 = ssub.s32 %s15, 1
      %s21 = ssub.s32 %s15, 2
      %s28 = sadd.s32 1, %s23
      %p29 = scmp.ge.s32.totalorder %s28, 1
      %s30 = scalar_select %p29, 0, %s28
      %s31 = sadd.s32 1, %s22
      %s32 = scalar_select %p29, %s31, %s22
      %p33 = scmp.ge.s32.totalorder %s32, 2
      %s34 = scalar_select %p33, 0, %s32
      %s35 = ssub.s32 %s22, %s34
      %p36 = scmp.eq.s32.totalorder %s35, 0
      %s38 = sadd.s32 %s37, 1
      %s39 = scalar_select %p36, %s37, %s38
      %p42 = pneg %p36
      %p43 = scmp.eq.s32.totalorder %s15, 1
      %p44 = por %p42, %p43
      %p45 = scmp.ne.s32.totalorder %s37, %s40
      %p46 = scmp.eq.s32.totalorder %s15, 0
      %p47 = por %p45, %p46
      %p48 = scmp.ne.s32.totalorder %s37, %s40
      %p49 = scmp.eq.s32.totalorder %s20, 1
      %p50 = por %p48, %p49
      %p51 = scmp.ne.s32.totalorder %s40, %s41
      %p52 = scmp.eq.s32.totalorder %s20, 0
      %p53 = por %p51, %p52
      %p54 = scmp.ne.s32.totalorder %s40, %s41
      %p55 = scmp.eq.s32.totalorder %s21, 1
      %p56 = por %p54, %p55
      %p58 = scmp.ne.s32.totalorder %s41, %s57
      %p59 = scmp.eq.s32.totalorder %s21, 0
      %p60 = por %p58, %p59
      %s62 = sadd.s32 %s61, 1
      %p65 = scmp.eq.s32.totalorder %s15, 1
      %p66 = scmp.ne.s32.totalorder %s61, %s63
      %p67 = scmp.eq.s32.totalorder %s15, 0
      %p68 = por %p66, %p67
      %p69 = scmp.ne.s32.totalorder %s61, %s63
      %p70 = scmp.eq.s32.totalorder %s20, 1
      %p71 = por %p69, %p70
      %p72 = scmp.ne.s32.totalorder %s63, %s64
      %p73 = scmp.eq.s32.totalorder %s20, 0
      %p74 = por %p72, %p73
      %p75 = scmp.ne.s32.totalorder %s63, %s64
      %p76 = scmp.eq.s32.totalorder %s21, 1
      %p77 = por %p75, %p76
      %p79 = scmp.ne.s32.totalorder %s64, %s78
      %p80 = scmp.eq.s32.totalorder %s21, 0
      %p81 = por %p79, %p80
      %s82 = ssub.s32 %s22, %s34
      %s83 = ssub.s32 %s23, %s30
      %s84 = sor.u32 %s82, %s83
      %p85 = scmp.eq.s32.totalorder %s84, 0
      %s87 = sadd.s32 %s86, 1
      %s88 = scalar_select %p85, %s86, %s87
      %p91 = pneg %p85
      %p92 = scmp.eq.s32.totalorder %s15, 1
      %p93 = por %p91, %p92
      %p94 = scmp.ne.s32.totalorder %s86, %s89
      %p95 = scmp.eq.s32.totalorder %s15, 0
      %p96 = por %p94, %p95
      %p97 = scmp.ne.s32.totalorder %s86, %s89
      %p98 = scmp.eq.s32.totalorder %s20, 1
      %p99 = por %p97, %p98
      %p100 = scmp.ne.s32.totalorder %s89, %s90
      %p101 = scmp.eq.s32.totalorder %s20, 0
      %p102 = por %p100, %p101
      %p103 = scmp.ne.s32.totalorder %s89, %s90
      %p104 = scmp.eq.s32.totalorder %s21, 1
      %p105 = por %p103, %p104
      %p107 = scmp.ne.s32.totalorder %s90, %s106
      %p108 = scmp.eq.s32.totalorder %s21, 0
      %p109 = por %p107, %p108
      %p110 = scmp.le.s32.totalorder 1, %s15
      %p111 = scmp.lt.s32.totalorder %s15, 3
      %p112 = pnand %p110, %p111
      %p113 = pneg %p112
      // Predicated region
      $region9: #{tpu_custom_call.1} parent=5 // pred_check
        _
      $region10: #{tpu_custom_call.1} parent=5 // pred_check_branch
        %115 = sbr.rel (%p112) target = $region12
      $region11: #{tpu_custom_call.1} parent=5 // pred_region
        %s116 = ssub.s32 %s15, 1
        // Predicated region
        $region13: #{tpu_custom_call.1} parent=11 // pred_check
          %p117 = pneg %p74
        $region14: #{tpu_custom_call.1} parent=11 // pred_check_branch
          %119 = sbr.rel (%p117) target = $region16
        $region15: #{tpu_custom_call.1} parent=11 // pred_region
          %s121 = ssub.s32 3072, 3072
          %122 = vsyncadd [#allocation9], %s121
          %s123 = sshll.u32 [#allocation8], 4
          %s124 = int_to_ptr.vmem [resolvable:$true] %s123
          %129 = dma.hbm_to_vmem [thread:$0]  %s1, 3072, %s124, [#allocation9], 192, 192, 12
        $region16: #{tpu_custom_call.1} parent=11 // pred_fallthru
          _
      $region12: #{tpu_custom_call.1} parent=5 // pred_fallthru
        _
      %p130 = scmp.lt.s32.totalorder %s15, 2
      // Predicated region
      $region17: #{tpu_custom_call.1} parent=5 // pred_check
        %p131 = pneg %p130
      $region18: #{tpu_custom_call.1} parent=5 // pred_check_branch
        %133 = sbr.rel (%p131) target = $region20
      $region19: #{tpu_custom_call.1} parent=5 // pred_region
        // Predicated region
        $region21: #{tpu_custom_call.1} parent=19 // pred_check
          %p134 = pneg %p47
        $region22: #{tpu_custom_call.1} parent=19 // pred_check_branch
          %136 = sbr.rel (%p134) target = $region24
        $region23: #{tpu_custom_call.1} parent=19 // pred_region
          %s137 = sand.u32 %s37, 1
          %s138 = scalar_lea.sflag [#allocation6], %s137
          %s139 = sand.u32 %s37, 1
          %s140 = smul.addr %s139, 4
          %s141 = scalar_lea.vmem [#allocation5], %s140
          %s143 = ssub.s32 64, 64
          %144 = vsyncadd %s138, %s143
          %s145 = smul.addr %s22, 64
          %s146 = scalar_lea.hbm %s0, %s145
          %s148 = sshll.u32 %s141, 4
          %s149 = int_to_ptr.vmem [resolvable:$true] %s148
          %151 = dma.hbm_to_vmem [thread:$0]  %s146, 64, %s149, %s138
        $region24: #{tpu_custom_call.1} parent=19 // pred_fallthru
          _
      $region20: #{tpu_custom_call.1} parent=5 // pred_fallthru
        _
      %p152 = scmp.le.s32.totalorder 1, %s15
      %p153 = scmp.lt.s32.totalorder %s15, 3
      %p154 = pnand %p152, %p153
      %p155 = pneg %p154
      // Predicated region
      $region25: #{tpu_custom_call.1} parent=5 // pred_check
        _
      $region26: #{tpu_custom_call.1} parent=5 // pred_check_branch
        %157 = sbr.rel (%p154) target = $region28
      $region27: #{tpu_custom_call.1} parent=5 // pred_region
        %s158 = ssub.s32 %s15, 1
        %s159 = sand.u32 %s40, 1
        %s160 = scalar_lea.sflag [#allocation6], %s159
        %s161 = sand.u32 %s40, 1
        %s162 = smul.addr %s161, 4
        %s163 = scalar_lea.vmem [#allocation5], %s162
        // Predicated region
        $region29: #{tpu_custom_call.1} parent=27 // pred_check
          %p164 = pneg %p53
        $region30: #{tpu_custom_call.1} parent=27 // pred_check_branch
          %166 = sbr.rel (%p164) target = $region32
        $region31: #{tpu_custom_call.1} parent=27 // pred_region
          %167 = dma.done %s160, 64
        $region32: #{tpu_custom_call.1} parent=27 // pred_fallthru
          _
        // Predicated region
        $region33: #{tpu_custom_call.1} parent=27 // pred_check
          %p168 = pneg %p74
        $region34: #{tpu_custom_call.1} parent=27 // pred_check_branch
          %170 = sbr.rel (%p168) target = $region36
        $region35: #{tpu_custom_call.1} parent=27 // pred_region
          %171 = dma.done [#allocation9], 3072
        $region36: #{tpu_custom_call.1} parent=27 // pred_fallthru
          _
        %s172 = sand.u32 %s40, 1
        %s173 = scalar_lea.sflag [#allocation6], %s172
        %s174 = sand.u32 %s40, 1
        %s175 = smul.addr %s174, 4
        %s176 = scalar_lea.vmem [#allocation5], %s175
        %p177 = pneg %p53
        %p178 = pneg %p50
        %p179 = pneg %p74
        %p180 = pneg %p71
        %p181 = pneg %p102
        %p182 = pneg %p99
        %s183 = sand.u32 %s89, 1
        %s184 = scalar_lea.sflag [#allocation7], %s183
        %s185 = sand.u32 %s89, 1
        %s186 = smul.addr %s185, 8
        %s187 = scalar_lea.vmem [#allocation10], %s186
        %s189 = smul.u32 %s25, 8
        %v190 = vld [vmem:[%s163] sm:$0xf]
        %v191 = vld [vmem:[#allocation8] sm:$0xff]
        %v192 = vld [vmem:[#allocation8 + $0x8] sm:$0xf]
        %v193 = vld [vmem:[#allocation8 + $0xc] sm:$0xff]
        %v194 = vld [vmem:[#allocation8 + $0x14] sm:$0xf]
        %v195 = vld [vmem:[#allocation8 + $0x18] sm:$0xff]
        %v196 = vld [vmem:[#allocation8 + $0x20] sm:$0xf]
        %v197 = vld [vmem:[#allocation8 + $0x24] sm:$0xff]
        %v198 = vld [vmem:[#allocation8 + $0x2c] sm:$0xf]
        %v199 = vld [vmem:[#allocation8 + $0x30] sm:$0xff]
        %v200 = vld [vmem:[#allocation8 + $0x38] sm:$0xf]
        %v201 = vld [vmem:[#allocation8 + $0x3c] sm:$0xff]
        %v202 = vld [vmem:[#allocation8 + $0x44] sm:$0xf]
        %v203 = vld [vmem:[#allocation8 + $0x48] sm:$0xff]
        %v204 = vld [vmem:[#allocation8 + $0x50] sm:$0xf]
        %v205 = vld [vmem:[#allocation8 + $0x54] sm:$0xff]
        %v206 = vld [vmem:[#allocation8 + $0x5c] sm:$0xf]
        %v207 = vld [vmem:[#allocation8 + $0x60] sm:$0xff]
        %v208 = vld [vmem:[#allocation8 + $0x68] sm:$0xf]
        %v209 = vld [vmem:[#allocation8 + $0x6c] sm:$0xff]
        %v210 = vld [vmem:[#allocation8 + $0x74] sm:$0xf]
        %v211 = vld [vmem:[#allocation8 + $0x78] sm:$0xff]
        %v212 = vld [vmem:[#allocation8 + $0x80] sm:$0xf]
        %v213 = vld [vmem:[#allocation8 + $0x84] sm:$0xff]
        %v214 = vld [vmem:[#allocation8 + $0x8c] sm:$0xf]
        %v215 = vld [vmem:[#allocation8 + $0x90] sm:$0xff]
        %v216 = vld [vmem:[#allocation8 + $0x98] sm:$0xf]
        %v217 = vld [vmem:[#allocation8 + $0x9c] sm:$0xff]
        %v218 = vld [vmem:[#allocation8 + $0xa4] sm:$0xf]
        %v219 = vld [vmem:[#allocation8 + $0xa8] sm:$0xff]
        %v220 = vld [vmem:[#allocation8 + $0xb0] sm:$0xf]
        %v221 = vld [vmem:[#allocation8 + $0xb4] sm:$0xff]
        %v222 = vld [vmem:[#allocation8 + $0xbc] sm:$0xf]
        %v255 = vunpack.c.l.b16 %v191
        %v256 = vunpack.c.h.b16 %v191
        %v257 = vunpack.c.l.b16 %v192
        %v258 = vunpack.c.l.b16 %v193
        %v259 = vunpack.c.h.b16 %v193
        %v260 = vunpack.c.l.b16 %v194
        %v261 = vunpack.c.l.b16 %v195
        %v262 = vunpack.c.h.b16 %v195
        %v263 = vunpack.c.l.b16 %v196
        %v264 = vunpack.c.l.b16 %v197
        %v265 = vunpack.c.h.b16 %v197
        %v266 = vunpack.c.l.b16 %v198
        %v267 = vunpack.c.l.b16 %v199
        %v268 = vunpack.c.h.b16 %v199
        %v269 = vunpack.c.l.b16 %v200
        %v270 = vunpack.c.l.b16 %v201
        %v271 = vunpack.c.h.b16 %v201
        %v272 = vunpack.c.l.b16 %v202
        %v273 = vunpack.c.l.b16 %v203
        %v274 = vunpack.c.h.b16 %v203
        %v275 = vunpack.c.l.b16 %v204
        %v276 = vunpack.c.l.b16 %v205
        %v277 = vunpack.c.h.b16 %v205
        %v278 = vunpack.c.l.b16 %v206
        %v279 = vunpack.c.l.b16 %v207
        %v280 = vunpack.c.h.b16 %v207
        %v281 = vunpack.c.l.b16 %v208
        %v282 = vunpack.c.l.b16 %v209
        %v283 = vunpack.c.h.b16 %v209
        %v284 = vunpack.c.l.b16 %v210
        %v285 = vunpack.c.l.b16 %v211
        %v286 = vunpack.c.h.b16 %v211
        %v287 = vunpack.c.l.b16 %v212
        %v288 = vunpack.c.l.b16 %v213
        %v289 = vunpack.c.h.b16 %v213
        %v290 = vunpack.c.l.b16 %v214
        %v291 = vunpack.c.l.b16 %v215
        %v292 = vunpack.c.h.b16 %v215
        %v293 = vunpack.c.l.b16 %v216
        %v294 = vunpack.c.l.b16 %v217
        %v295 = vunpack.c.h.b16 %v217
        %v296 = vunpack.c.l.b16 %v218
        %v297 = vunpack.c.l.b16 %v219
        %v298 = vunpack.c.h.b16 %v219
        %v299 = vunpack.c.l.b16 %v220
        %v300 = vunpack.c.l.b16 %v221
        %v301 = vunpack.c.h.b16 %v221
        %v302 = vunpack.c.l.b16 %v222
        %v303 = vpack.c.b16 %v258, %v255
        %v304 = vpack.c.b16 %v259, %v256
        %v305 = vpack.c.b16 %v260, %v257
        %v306 = vpack.c.b16 %v264, %v261
        %v307 = vpack.c.b16 %v265, %v262
        %v308 = vpack.c.b16 %v266, %v263
        %v309 = vpack.c.b16 %v270, %v267
        %v310 = vpack.c.b16 %v271, %v268
        %v311 = vpack.c.b16 %v272, %v269
        %v312 = vpack.c.b16 %v276, %v273
        %v313 = vpack.c.b16 %v277, %v274
        %v314 = vpack.c.b16 %v278, %v275
        %v315 = vpack.c.b16 %v282, %v279
        %v316 = vpack.c.b16 %v283, %v280
        %v317 = vpack.c.b16 %v284, %v281
        %v318 = vpack.c.b16 %v288, %v285
        %v319 = vpack.c.b16 %v289, %v286
        %v320 = vpack.c.b16 %v290, %v287
        %v321 = vpack.c.b16 %v294, %v291
        %v322 = vpack.c.b16 %v295, %v292
        %v323 = vpack.c.b16 %v296, %v293
        %v324 = vpack.c.b16 %v300, %v297
        %v325 = vpack.c.b16 %v301, %v298
        %v326 = vpack.c.b16 %v302, %v299
        %351 = vmatprep.subr.bf16.mxu0 %v325
        %352 = vmatpush1.bf16.msra.mxu0 %v324
        %353 = vmatprep.subr.bf16.mxu0 %v322
        %354 = vmatpush1.bf16.msra.mxu0 %v321
        %355 = vmatprep.subr.bf16.mxu0 %v319
        %356 = vmatpush1.bf16.msra.mxu0 %v318
        %357 = vmatprep.subr.bf16.mxu0 %v316
        %358 = vmatpush1.bf16.msra.mxu0 %v315
        %359 = vmatprep.subr.bf16.mxu0 %v313
        %360 = vmatpush1.bf16.msra.mxu0 %v312
        %361 = vmatprep.subr.bf16.mxu0 %v310
        %362 = vmatpush1.bf16.msra.mxu0 %v309
        %363 = vmatprep.subr.bf16.mxu0 %v307
        %364 = vmatpush1.bf16.msra.mxu0 %v306
        %365 = vmatprep.subr.bf16.mxu0 %v304
        %366 = vmatpush1.bf16.msra.mxu0 %v303
        %367 = vmatprep.subr.bf16.mxu0 0
        %368 = vmatpush2.bf16.msra.mxu0 0
        %369 = vmatprep.subr.bf16.mxu0 0
        %370 = vmatpush2.bf16.msra.mxu0 0
        %371 = vmatprep.subr.bf16.mxu0 0
        %372 = vmatpush2.bf16.msra.mxu0 0
        %373 = vmatprep.subr.bf16.mxu0 0
        %374 = vmatpush2.bf16.msra.mxu0 0
        %375 = vmatprep.subr.bf16.mxu0 0
        %376 = vmatpush2.bf16.msra.mxu0 0
        %377 = vmatprep.subr.bf16.mxu0 0
        %378 = vmatpush2.bf16.msra.mxu0 0
        %379 = vmatprep.subr.bf16.mxu0 0
        %380 = vmatpush2.bf16.msra.mxu0 0
        %381 = vmatprep.subr.bf16.mxu0 0
        %382 = vmatpush2.bf16.msra.mxu0 0
        %383 = vmatprep.mubr.bf16.mxu0 0
        %384 = vmatmul.mubr.bf16.gmra.mxu0 %v190
        %v385 = vpop.f32.mrf.mxu0
        %v386 = vadd.f32 0.0, %v385
        %v387 = vpop.f32.mrf.mxu0
        %v388 = vadd.f32 0.0, %v387
        %v389 = vpop.f32.mrf.mxu0
        %v390 = vpop.f32.mrf.mxu0
        %391 = vdwg.mxu0
        %392 = vmatprep.subr.bf16.mxu0 0
        %393 = vmatpush1.bf16.msra.mxu0 %v326
        %394 = vmatprep.subr.bf16.mxu0 0
        %395 = vmatpush1.bf16.msra.mxu0 %v323
        %396 = vmatprep.subr.bf16.mxu0 0
        %397 = vmatpush1.bf16.msra.mxu0 %v320
        %398 = vmatprep.subr.bf16.mxu0 0
        %399 = vmatpush1.bf16.msra.mxu0 %v317
        %400 = vmatprep.subr.bf16.mxu0 0
        %401 = vmatpush1.bf16.msra.mxu0 %v314
        %402 = vmatprep.subr.bf16.mxu0 0
        %403 = vmatpush1.bf16.msra.mxu0 %v311
        %404 = vmatprep.subr.bf16.mxu0 0
        %405 = vmatpush1.bf16.msra.mxu0 %v308
        %406 = vmatprep.subr.bf16.mxu0 0
        %407 = vmatpush1.bf16.msra.mxu0 %v305
        %408 = vmatprep.subr.bf16.mxu0 0
        %409 = vmatpush2.bf16.msra.mxu0 0
        %410 = vmatprep.subr.bf16.mxu0 0
        %411 = vmatpush2.bf16.msra.mxu0 0
        %412 = vmatprep.subr.bf16.mxu0 0
        %413 = vmatpush2.bf16.msra.mxu0 0
        %414 = vmatprep.subr.bf16.mxu0 0
        %415 = vmatpush2.bf16.msra.mxu0 0
        %416 = vmatprep.subr.bf16.mxu0 0
        %417 = vmatpush2.bf16.msra.mxu0 0
        %418 = vmatprep.subr.bf16.mxu0 0
        %419 = vmatpush2.bf16.msra.mxu0 0
        %420 = vmatprep.subr.bf16.mxu0 0
        %421 = vmatpush2.bf16.msra.mxu0 0
        %422 = vmatprep.subr.bf16.mxu0 0
        %423 = vmatpush2.bf16.msra.mxu0 0
        %424 = vmatprep.mubr.bf16.mxu0 0
        %425 = vmatmul.mubr.bf16.gmra.mxu0 %v190
        %v426 = vpop.f32.mrf.mxu0
        %v427 = vadd.f32 0.0, %v426
        %v428 = vpop.f32.mrf.mxu0
        %v429 = vpop.f32.mrf.mxu0
        %v430 = vpop.f32.mrf.mxu0
        %431 = vdwg.mxu0
        %v432 = vmul.f32 %v386, 0.70710677
        %v433 = vpack.c.bf16 %v432, %v432
        %434 = vst [vmem:[#allocation2] sm:$0xf] %v433
        %v435 = vpack.c.bf16 %v388, %v388
        %436 = vst [vmem:[#allocation3] sm:$0xf] %v435
        %v437 = vpack.c.bf16 %v427, %v427
        %438 = vst [vmem:[#allocation4] sm:$0xf] %v437
        %v439 = vlaneseq
        %v440 = vshrl.u32 %v439, 7
        %v441 = vstv %s189
        %v442 = vadd.s32 %v441, %v440
        %v443 = vlaneseq
        %v444 = vand.u32 %v443, 127
        %vm445 = vcmp.gt.s32.totalorder %v444, %v442
        %vm446 = vcmp.ge.s32.totalorder %v444, 6
        %vm447 = vmor %vm445, %vm446
        %v448 = vld [vmem:[#allocation2] sm:$0xf]
        %v449 = vld [vmem:[#allocation3] sm:$0xf]
        %v450 = vld [vmem:[#allocation4] sm:$0xf]
        %451 = vmatprep.subr.bf16.mxu0 0
        %452 = vmatpush1.bf16.xpose.msra.mxu0 0
        %453 = vmatprep.subr.bf16.mxu0 0
        %454 = vmatpush1.bf16.xpose.msra.mxu0 0
        %455 = vmatprep.subr.bf16.mxu0 0
        %456 = vmatpush1.bf16.xpose.msra.mxu0 0
        %457 = vmatprep.subr.bf16.mxu0 0
        %458 = vmatpush1.bf16.xpose.msra.mxu0 0
        %459 = vmatprep.subr.bf16.mxu0 0
        %460 = vmatpush1.bf16.xpose.msra.mxu0 0
        %461 = vmatprep.subr.bf16.mxu0 0
        %462 = vmatpush1.bf16.xpose.msra.mxu0 0
        %463 = vmatprep.subr.bf16.mxu0 0
        %464 = vmatpush1.bf16.xpose.msra.mxu0 0
        %465 = vmatprep.subr.bf16.mxu0 0
        %466 = vmatpush1.bf16.xpose.msra.mxu0 %v449
        %467 = vmatprep.subr.bf16.mxu0 0
        %468 = vmatpush2.bf16.xpose.msra.mxu0 0
        %469 = vmatprep.subr.bf16.mxu0 0
        %470 = vmatpush2.bf16.xpose.msra.mxu0 0
        %471 = vmatprep.subr.bf16.mxu0 0
        %472 = vmatpush2.bf16.xpose.msra.mxu0 0
        %473 = vmatprep.subr.bf16.mxu0 0
        %474 = vmatpush2.bf16.xpose.msra.mxu0 0
        %475 = vmatprep.subr.bf16.mxu0 0
        %476 = vmatpush2.bf16.xpose.msra.mxu0 0
        %477 = vmatprep.subr.bf16.mxu0 0
        %478 = vmatpush2.bf16.xpose.msra.mxu0 0
        %479 = vmatprep.subr.bf16.mxu0 0
        %480 = vmatpush2.bf16.xpose.msra.mxu0 0
        %481 = vmatprep.subr.bf16.mxu0 0
        %482 = vmatpush2.bf16.xpose.msra.mxu0 0
        %483 = vmatprep.mubr.bf16.mxu0 0
        %484 = vmatmul.mubr.bf16.gmra.mxu0 %v448
        %v485 = vpop.f32.mrf.mxu0
        %v486 = vadd.f32 0.0, %v485
        %v487 = vpop.f32.mrf.mxu0
        %v488 = vpop.f32.mrf.mxu0
        %v489 = vpop.f32.mrf.mxu0
        %490 = vdwg.mxu0
        %v491 = vsel %vm447, -1e+30, %v486
        %vm492 = vcmask 64512
        %v493 = vsel %vm492, %v491, -inf
        %494 = vmax.xlane.f32.xlu0 %v493
        %v495 = vpop.xlane.xlu0 %494
        %v496 = vsub.f32 %v491, %v495
        %v497 = vmul.f32 %v496, 1.442695
        %v498 = vpow.pop %v497
        %v499 = vsel %vm492, %v498, 0.0
        %500 = vadd.xlane.f32.xlu0 %v499
        %v501 = vpop.xlane.xlu0 %500
        %v502 = vrcp.pop %v501
        %v503 = vmul.f32 %v498, %v502
        %v504 = vpack.c.bf16 %v503, %v503
        %v506 = vsel %vm492, %v504, 0
        %vm508 = vcmask 1043456
        %v510 = vsel %vm508, %v450, 0
        %512 = vmatprep.subr.bf16.mxu0 0
        %513 = vmatpush1.bf16.msra.mxu0 0
        %514 = vmatprep.subr.bf16.mxu0 0
        %515 = vmatpush1.bf16.msra.mxu0 0
        %516 = vmatprep.subr.bf16.mxu0 0
        %517 = vmatpush1.bf16.msra.mxu0 0
        %518 = vmatprep.subr.bf16.mxu0 0
        %519 = vmatpush1.bf16.msra.mxu0 0
        %520 = vmatprep.subr.bf16.mxu0 0
        %521 = vmatpush1.bf16.msra.mxu0 0
        %522 = vmatprep.subr.bf16.mxu0 0
        %523 = vmatpush1.bf16.msra.mxu0 0
        %524 = vmatprep.subr.bf16.mxu0 0
        %525 = vmatpush1.bf16.msra.mxu0 0
        %526 = vmatprep.subr.bf16.mxu0 0
        %527 = vmatpush1.bf16.msra.mxu0 %v510
        %528 = vmatprep.subr.bf16.mxu0 0
        %529 = vmatpush2.bf16.msra.mxu0 0
        %530 = vmatprep.subr.bf16.mxu0 0
        %531 = vmatpush2.bf16.msra.mxu0 0
        %532 = vmatprep.subr.bf16.mxu0 0
        %533 = vmatpush2.bf16.msra.mxu0 0
        %534 = vmatprep.subr.bf16.mxu0 0
        %535 = vmatpush2.bf16.msra.mxu0 0
        %536 = vmatprep.subr.bf16.mxu0 0
        %537 = vmatpush2.bf16.msra.mxu0 0
        %538 = vmatprep.subr.bf16.mxu0 0
        %539 = vmatpush2.bf16.msra.mxu0 0
        %540 = vmatprep.subr.bf16.mxu0 0
        %541 = vmatpush2.bf16.msra.mxu0 0
        %542 = vmatprep.subr.bf16.mxu0 0
        %543 = vmatpush2.bf16.msra.mxu0 0
        %544 = vmatprep.mubr.bf16.mxu0 0
        %545 = vmatmul.mubr.bf16.gmra.mxu0 %v506
        %v546 = vpop.f32.mrf.mxu0
        %v547 = vadd.f32 0.0, %v546
        %v548 = vpop.f32.mrf.mxu0
        %v549 = vpop.f32.mrf.mxu0
        %v550 = vpop.f32.mrf.mxu0
        %551 = vdwg.mxu0
        %552 = vst [vmem:[%s187] sm:$0xff] %v547
        %s553 = sand.u32 %s89, 1
        %s554 = scalar_lea.sflag [#allocation7], %s553
        %s555 = sand.u32 %s89, 1
        %s556 = smul.addr %s555, 8
        %s557 = scalar_lea.vmem [#allocation10], %s556
        // Predicated region
        $region37: #{tpu_custom_call.1} parent=27 // pred_check
          %p558 = pneg %p99
        $region38: #{tpu_custom_call.1} parent=27 // pred_check_branch
          %560 = sbr.rel (%p558) target = $region40
        $region39: #{tpu_custom_call.1} parent=27 // pred_region
          %s562 = ssub.s32 128, 128
          %563 = vsyncadd %s554, %s562
          %s564 = sadd.s32 %s25, %s24
          %s565 = smul.addr %s564, 128
          %s566 = scalar_lea.hbm %s2, %s565
          %s568 = sshll.u32 %s557, 4
          %s569 = int_to_ptr.vmem [resolvable:$true] %s568
          %571 = dma.vmem_to_hbm [thread:$0]  %s569, 128, %s566, %s554
        $region40: #{tpu_custom_call.1} parent=27 // pred_fallthru
          _
      $region28: #{tpu_custom_call.1} parent=5 // pred_fallthru
        _
      %p572 = scmp.le.s32.totalorder 2, %s15
      // Predicated region
      $region41: #{tpu_custom_call.1} parent=5 // pred_check
        %p573 = pneg %p572
      $region42: #{tpu_custom_call.1} parent=5 // pred_check_branch
        %575 = sbr.rel (%p573) target = $region44
      $region43: #{tpu_custom_call.1} parent=5 // pred_region
        %s576 = ssub.s32 %s15, 2
        // Predicated region
        $region45: #{tpu_custom_call.1} parent=43 // pred_check
          %p577 = pneg %p105
        $region46: #{tpu_custom_call.1} parent=43 // pred_check_branch
          %579 = sbr.rel (%p577) target = $region48
        $region47: #{tpu_custom_call.1} parent=43 // pred_region
          %s580 = sand.u32 %s90, 1
          %s581 = scalar_lea.sflag [#allocation7], %s580
          %s582 = sand.u32 %s90, 1
          %s583 = smul.addr %s582, 8
          %s584 = scalar_lea.vmem [#allocation10], %s583
          %585 = dma.done %s581, 128
        $region48: #{tpu_custom_call.1} parent=43 // pred_fallthru
          _
      $region44: #{tpu_custom_call.1} parent=5 // pred_fallthru
        _
    $region6: #{tpu_custom_call.1} parent=1 // loop_footer
      %s19 = sadd.s32 1, %s15
    $region7: #{tpu_custom_call.1} parent=1 // loop_footer_branch
      %14 = sbr.rel target = $region3
    $region8: #{tpu_custom_call.1} parent=1 // loop_exit
      _
    %586 = vsyncpa [#allocation6], 1
    %s587 = scalar_lea.sflag [#allocation6], 1
    %588 = vsyncpa %s587, 1
    %589 = vsyncpa [#allocation9], 1
    %590 = vsyncpa [#allocation7], 1
    %s591 = scalar_lea.sflag [#allocation7], 1
    %592 = vsyncpa %s591, 1

</llo_original>
